<compile_context>
chip_gen: v7x
topology: tpu7x:2x2x1
jax: 0.10.0
libtpu: 0.0.40
codegen_flags: <defaults>
</compile_context>

<pallas_src>
import functools

import jax
import jax.numpy as jnp
from jax.experimental import pallas as pl
from jax.experimental.pallas import tpu as pltpu

_LANE = 128


def _pad8(n):
    return ((n + 7) // 8) * 8


def _pack_layout(hidden_dim, input_dim, output_dim):
    """Row layout of the single packed weight array (all offsets 8-aligned)."""
    H, Din, Dout = hidden_dim, input_dim, output_dim
    G = 4 * H                                          # gate width
    Dp = ((Dout + _LANE - 1) // _LANE) * _LANE         # lane-dense FC width
    W = max(G, Dp)                                     # pack lane width
    off_whh = 0
    off_wfc = off_whh + _pad8(H)
    off_wih = off_wfc + _pad8(H)
    off_b = off_wih + _pad8(Din)
    off_bfc = off_b + 1
    rows = _pad8(off_bfc + 1)
    return dict(G=G, Dp=Dp, W=W, rows=rows,
                off_whh=off_whh, off_wfc=off_wfc, off_wih=off_wih,
                off_b=off_b, off_bfc=off_bfc)


def prepare_decoder_params(params):
    """One-time prep: transpose, fuse LSTM biases, lane-pad FC, pack into ONE array."""
    w_ih = jnp.asarray(params["w_ih"], jnp.float32)    # (4H, Din)
    w_hh = jnp.asarray(params["w_hh"], jnp.float32)    # (4H, H)
    b = (jnp.asarray(params["b_ih"], jnp.float32)
         + jnp.asarray(params["b_hh"], jnp.float32))   # (4H,)
    w_fc = jnp.asarray(params["w_fc"], jnp.float32)    # (Dout, H)
    b_fc = jnp.asarray(params["b_fc"], jnp.float32)    # (Dout,)

    H = w_hh.shape[1]
    Din = w_ih.shape[1]
    Dout = w_fc.shape[0]
    lay = _pack_layout(H, Din, Dout)

    pack = jnp.zeros((lay["rows"], lay["W"]), jnp.float32)
    pack = pack.at[lay["off_whh"]:lay["off_whh"] + H, :lay["G"]].set(w_hh.T)
    pack = pack.at[lay["off_wfc"]:lay["off_wfc"] + H, :Dout].set(w_fc.T)
    pack = pack.at[lay["off_wih"]:lay["off_wih"] + Din, :lay["G"]].set(w_ih.T)
    pack = pack.at[lay["off_b"], :lay["G"]].set(b)
    pack = pack.at[lay["off_bfc"], :Dout].set(b_fc)
    return pack


def _decoder_kernel(T, B, H, Din, lay,
                    x_ref, h0_ref, c0_ref, wpack_ref,
                    pred_ref, hout_ref, cout_ref):
    # x_ref:     (B*T, Din)   batch-major flattened input (row b*T + t)
    # wpack_ref: (rows, W)    packed [W_hh^T | W_fc^T(pad) | W_ih^T | b | b_fc]
    # pred_ref:  (B, T, Dp)   lane-dense predictions (zero-padded lanes)
    G, Dp = lay["G"], lay["Dp"]

    Wp = wpack_ref[...]
    whh = Wp[lay["off_whh"]:lay["off_whh"] + H, :G]          # (H, 4H)
    wfc = Wp[lay["off_wfc"]:lay["off_wfc"] + H, :Dp]         # (H, Dp) lane-dense
    wih = Wp[lay["off_wih"]:lay["off_wih"] + Din, :G]        # (Din, 4H)
    b = Wp[lay["off_b"]:lay["off_b"] + 1, :G]                # (1, 4H) fused LSTM bias
    bfc = Wp[lay["off_bfc"]:lay["off_bfc"] + 1, :Dp]         # (1, Dp)

    # ---- hoisted input projection: ONE (B*T, Din) x (Din, 4H) MXU matmul ----
    x = x_ref[...]
    x_proj = (jnp.dot(x, wih, preferred_element_type=jnp.float32) + b
              ).reshape(B, T, G)                             # (B, T, 4H)

    h = h0_ref[...]                                          # (B, H) f32
    c = c0_ref[...]                                          # (B, H) f32

    # ---- fully unrolled recurrence (T static & small); history stays in vregs
    hs = []
    for t in range(T):
        gates = x_proj[:, t, :] + jnp.dot(h, whh,
                                          preferred_element_type=jnp.float32)
        # sigmoid via one native EUP tanh pass (instead of exp + reciprocal)
        sg = 0.5 * (1.0 + jnp.tanh(0.5 * gates))             # (B, 4H)
        tg = jnp.tanh(gates)                                 # (B, 4H)
        # PyTorch gate ordering: input, forget, cell(g), output.
        i = sg[:, 0 * H:1 * H]
        f = sg[:, 1 * H:2 * H]
        g = tg[:, 2 * H:3 * H]
        o = sg[:, 3 * H:4 * H]
        c = f * c + i * g
        h = o * jnp.tanh(c)
        hs.append(h)

    # ---- deferred FC: ONE (T*B, H) x (H, Dp) lane-dense MXU matmul ----------
    hs_tm = jnp.concatenate(hs, axis=0)                      # (T*B, H), in vregs
    preds = jnp.dot(hs_tm, wfc, preferred_element_type=jnp.float32) + bfc

    # write predictions in (B, T, Dp) order -> wrapper only slices lanes
    for t in range(T):
        pred_ref[:, t, :] = preds[t * B:(t + 1) * B, :].astype(pred_ref.dtype)

    hout_ref[...] = h
    cout_ref[...] = c


@jax.jit
def decoder_forward(x, hidden, cell, w_pack):
    """Mirrors Decoder.forward(x, hidden, cell) -> (predictions, hidden, cell)."""
    B, T, D_out = x.shape
    H = hidden.shape[-1]
    # num_layers == 1, PyTorch LSTM state layout (1, B, H); LSTM input dim == D_out
    assert hidden.shape == (1, B, H) and cell.shape == (1, B, H)
    lay = _pack_layout(H, D_out, D_out)
    assert w_pack.shape == (lay["rows"], lay["W"])

    # Free reshapes only — no transposes on x / states / predictions.
    x2 = x.reshape(B * T, D_out).astype(jnp.float32)
    h0 = hidden.reshape(B, H).astype(jnp.float32)
    c0 = cell.reshape(B, H).astype(jnp.float32)

    vmem = pl.BlockSpec(memory_space=pltpu.MemorySpace.VMEM)
    kernel = functools.partial(_decoder_kernel, T, B, H, D_out, lay)

    # Single-invocation (gridless) kernel; everything fits trivially in VMEM.
    # TODO(synk): at large B, add a batch grid axis with
    # dimension_semantics=("parallel",) so v7x's 2 TensorCores are both used,
    # and tile T ("arbitrary") if x_proj ever approaches the VMEM limit.
    pred_pad, h, c = pl.pallas_call(
        kernel,
        out_shape=(jax.ShapeDtypeStruct((B, T, lay["Dp"]), x.dtype),
                   jax.ShapeDtypeStruct((B, H), jnp.float32),
                   jax.ShapeDtypeStruct((B, H), jnp.float32)),
        in_specs=[vmem, vmem, vmem, vmem],
        out_specs=(vmem, vmem, vmem),
    )(x2, h0, c0, w_pack)

    preds = pred_pad[:, :, :D_out]                 # drop zero-padded output lanes
    return preds, h.reshape(1, B, H), c.reshape(1, B, H)


def init_params(key, output_dim, hidden_dim):
    """Deterministic init matching PyTorch LSTM/Linear parameter shapes."""
    k = 1.0 / jnp.sqrt(hidden_dim)
    ks = jax.random.split(key, 6)
    uni = lambda kk, shape: jax.random.uniform(kk, shape, jnp.float32, -k, k)
    return {
        "w_ih": uni(ks[0], (4 * hidden_dim, output_dim)),
        "w_hh": uni(ks[1], (4 * hidden_dim, hidden_dim)),
        "b_ih": uni(ks[2], (4 * hidden_dim,)),
        "b_hh": uni(ks[3], (4 * hidden_dim,)),
        "w_fc": uni(ks[4], (output_dim, hidden_dim)),
        "b_fc": uni(ks[5], (output_dim,)),
    }


def _reference_forward(x, hidden, cell, params):
    """Pure-JAX reference of the PyTorch Decoder (for correctness check)."""
    B, T, D_out = x.shape
    H = hidden.shape[-1]
    wih_t = params["w_ih"].T
    whh_t = params["w_hh"].T
    b = params["b_ih"] + params["b_hh"]
    h, c = hidden[0], cell[0]
    preds = []
    for t in range(T):
        gates = x[:, t, :] @ wih_t + h @ whh_t + b
        i = jax.nn.sigmoid(gates[:, 0 * H:1 * H])
        f = jax.nn.sigmoid(gates[:, 1 * H:2 * H])
        g = jnp.tanh(gates[:, 2 * H:3 * H])
        o = jax.nn.sigmoid(gates[:, 3 * H:4 * H])
        c = f * c + i * g
        h = o * jnp.tanh(c)
        preds.append(h @ params["w_fc"].T + params["b_fc"])
    return jnp.stack(preds, axis=1), h[None], c[None]


if __name__ == "__main__":
    B, T = 2, 8
    output_dim, hidden_dim = 4, 32

    key = jax.random.PRNGKey(0)
    kx, kh, kc, kp = jax.random.split(key, 4)
    x = jax.random.normal(kx, (B, T, output_dim), jnp.float32)
    hidden = jax.random.normal(kh, (1, B, hidden_dim), jnp.float32)
    cell = jax.random.normal(kc, (1, B, hidden_dim), jnp.float32)
    params = init_params(kp, output_dim, hidden_dim)
    w_pack = prepare_decoder_params(params)

    preds, h_out, c_out = decoder_forward(x, hidden, cell, w_pack)
    jax.block_until_ready((preds, h_out, c_out))

    assert preds.shape == (B, T, output_dim)
    assert h_out.shape == (1, B, hidden_dim)
    assert c_out.shape == (1, B, hidden_dim)

    ref_p, ref_h, ref_c = _reference_forward(x, hidden, cell, params)
    assert jnp.allclose(preds, ref_p, atol=1e-4, rtol=1e-4)
    assert jnp.allclose(h_out, ref_h, atol=1e-4, rtol=1e-4)
    assert jnp.allclose(c_out, ref_c, atol=1e-4, rtol=1e-4)

    print("KERNEL_OK")
</pallas_src>

<mosaic_0001>
module attributes {stable_mosaic.version = 11 : i64} {
  func.func @_decoder_kernel(%arg0: memref<16x4xf32, #tpu.memory_space<vmem>>, %arg1: memref<2x32xf32, #tpu.memory_space<vmem>>, %arg2: memref<2x32xf32, #tpu.memory_space<vmem>>, %arg3: memref<80x128xf32, #tpu.memory_space<vmem>>, %arg4: memref<2x8x128xf32, #tpu.memory_space<vmem>>, %arg5: memref<2x32xf32, #tpu.memory_space<vmem>>, %arg6: memref<2x32xf32, #tpu.memory_space<vmem>>) attributes {dimension_semantics = [], scalar_prefetch = 0 : i64, scratch_operands = 0 : i64, tpu.core_type = #tpu.core_type<tc>} {
    %c0 = arith.constant 0 : index
    %c0_0 = arith.constant 0 : index
    %0 = vector.load %arg3[%c0, %c0_0] : memref<80x128xf32, #tpu.memory_space<vmem>>, vector<80x128xf32>
    %1 = vector.extract_strided_slice %0 {offsets = [0, 0], sizes = [32, 128], strides = [1, 1]} : vector<80x128xf32> to vector<32x128xf32>
    %2 = vector.extract_strided_slice %0 {offsets = [32, 0], sizes = [32, 128], strides = [1, 1]} : vector<80x128xf32> to vector<32x128xf32>
    %3 = vector.extract_strided_slice %0 {offsets = [64, 0], sizes = [4, 128], strides = [1, 1]} : vector<80x128xf32> to vector<4x128xf32>
    %4 = vector.extract_strided_slice %0 {offsets = [72, 0], sizes = [1, 128], strides = [1, 1]} : vector<80x128xf32> to vector<1x128xf32>
    %5 = vector.extract_strided_slice %0 {offsets = [73, 0], sizes = [1, 128], strides = [1, 1]} : vector<80x128xf32> to vector<1x128xf32>
    %c0_1 = arith.constant 0 : index
    %c0_2 = arith.constant 0 : index
    %6 = vector.load %arg0[%c0_1, %c0_2] : memref<16x4xf32, #tpu.memory_space<vmem>>, vector<16x4xf32>
    %cst = arith.constant dense<0.000000e+00> : vector<16x128xf32>
    %7 = tpu.matmul %6, %3, %cst {dimension_numbers = #tpu.dot_dimension_numbers<[1], [0], [0], [1], [0, 0, 1, 1], [], []>} : vector<16x4xf32>, vector<4x128xf32>, vector<16x128xf32> -> vector<16x128xf32>
    %8 = vector.broadcast %4 : vector<1x128xf32> to vector<16x128xf32>
    %9 = arith.addf %7, %8 : vector<16x128xf32>
    %10 = vector.shape_cast %9 : vector<16x128xf32> to vector<2x8x128xf32>
    %c0_3 = arith.constant 0 : index
    %c0_4 = arith.constant 0 : index
    %11 = vector.load %arg1[%c0_3, %c0_4] : memref<2x32xf32, #tpu.memory_space<vmem>>, vector<2x32xf32>
    %c0_5 = arith.constant 0 : index
    %c0_6 = arith.constant 0 : index
    %12 = vector.load %arg2[%c0_5, %c0_6] : memref<2x32xf32, #tpu.memory_space<vmem>>, vector<2x32xf32>
    %13 = vector.extract_strided_slice %10 {offsets = [0, 0, 0], sizes = [2, 1, 128], strides = [1, 1, 1]} : vector<2x8x128xf32> to vector<2x1x128xf32>
    %14 = vector.shape_cast %13 : vector<2x1x128xf32> to vector<2x128xf32>
    %cst_7 = arith.constant dense<0.000000e+00> : vector<2x128xf32>
    %15 = tpu.matmul %11, %1, %cst_7 {dimension_numbers = #tpu.dot_dimension_numbers<[1], [0], [0], [1], [0, 0, 1, 1], [], []>} : vector<2x32xf32>, vector<32x128xf32>, vector<2x128xf32> -> vector<2x128xf32>
    %16 = arith.addf %14, %15 : vector<2x128xf32>
    %cst_8 = arith.constant 5.000000e-01 : f32
    %17 = vector.broadcast %cst_8 : f32 to vector<2x128xf32>
    %18 = arith.mulf %17, %16 : vector<2x128xf32>
    %19 = math.tanh %18 : vector<2x128xf32>
    %cst_9 = arith.constant 1.000000e+00 : f32
    %20 = vector.broadcast %cst_9 : f32 to vector<2x128xf32>
    %21 = arith.addf %20, %19 : vector<2x128xf32>
    %cst_10 = arith.constant 5.000000e-01 : f32
    %22 = vector.broadcast %cst_10 : f32 to vector<2x128xf32>
    %23 = arith.mulf %22, %21 : vector<2x128xf32>
    %24 = math.tanh %16 : vector<2x128xf32>
    %25 = vector.extract_strided_slice %23 {offsets = [0, 0], sizes = [2, 32], strides = [1, 1]} : vector<2x128xf32> to vector<2x32xf32>
    %26 = vector.extract_strided_slice %23 {offsets = [0, 32], sizes = [2, 32], strides = [1, 1]} : vector<2x128xf32> to vector<2x32xf32>
    %27 = vector.extract_strided_slice %24 {offsets = [0, 64], sizes = [2, 32], strides = [1, 1]} : vector<2x128xf32> to vector<2x32xf32>
    %28 = vector.extract_strided_slice %23 {offsets = [0, 96], sizes = [2, 32], strides = [1, 1]} : vector<2x128xf32> to vector<2x32xf32>
    %29 = arith.mulf %26, %12 : vector<2x32xf32>
    %30 = arith.mulf %25, %27 : vector<2x32xf32>
    %31 = arith.addf %29, %30 : vector<2x32xf32>
    %32 = math.tanh %31 : vector<2x32xf32>
    %33 = arith.mulf %28, %32 : vector<2x32xf32>
    %34 = vector.extract_strided_slice %10 {offsets = [0, 1, 0], sizes = [2, 1, 128], strides = [1, 1, 1]} : vector<2x8x128xf32> to vector<2x1x128xf32>
    %35 = vector.shape_cast %34 : vector<2x1x128xf32> to vector<2x128xf32>
    %cst_11 = arith.constant dense<0.000000e+00> : vector<2x128xf32>
    %36 = tpu.matmul %33, %1, %cst_11 {dimension_numbers = #tpu.dot_dimension_numbers<[1], [0], [0], [1], [0, 0, 1, 1], [], []>} : vector<2x32xf32>, vector<32x128xf32>, vector<2x128xf32> -> vector<2x128xf32>
    %37 = arith.addf %35, %36 : vector<2x128xf32>
    %cst_12 = arith.constant 5.000000e-01 : f32
    %38 = vector.broadcast %cst_12 : f32 to vector<2x128xf32>
    %39 = arith.mulf %38, %37 : vector<2x128xf32>
    %40 = math.tanh %39 : vector<2x128xf32>
    %cst_13 = arith.constant 1.000000e+00 : f32
    %41 = vector.broadcast %cst_13 : f32 to vector<2x128xf32>
    %42 = arith.addf %41, %40 : vector<2x128xf32>
    %cst_14 = arith.constant 5.000000e-01 : f32
    %43 = vector.broadcast %cst_14 : f32 to vector<2x128xf32>
    %44 = arith.mulf %43, %42 : vector<2x128xf32>
    %45 = math.tanh %37 : vector<2x128xf32>
    %46 = vector.extract_strided_slice %44 {offsets = [0, 0], sizes = [2, 32], strides = [1, 1]} : vector<2x128xf32> to vector<2x32xf32>
    %47 = vector.extract_strided_slice %44 {offsets = [0, 32], sizes = [2, 32], strides = [1, 1]} : vector<2x128xf32> to vector<2x32xf32>
    %48 = vector.extract_strided_slice %45 {offsets = [0, 64], sizes = [2, 32], strides = [1, 1]} : vector<2x128xf32> to vector<2x32xf32>
    %49 = vector.extract_strided_slice %44 {offsets = [0, 96], sizes = [2, 32], strides = [1, 1]} : vector<2x128xf32> to vector<2x32xf32>
    %50 = arith.mulf %47, %31 : vector<2x32xf32>
    %51 = arith.mulf %46, %48 : vector<2x32xf32>
    %52 = arith.addf %50, %51 : vector<2x32xf32>
    %53 = math.tanh %52 : vector<2x32xf32>
    %54 = arith.mulf %49, %53 : vector<2x32xf32>
    %55 = vector.extract_strided_slice %10 {offsets = [0, 2, 0], sizes = [2, 1, 128], strides = [1, 1, 1]} : vector<2x8x128xf32> to vector<2x1x128xf32>
    %56 = vector.shape_cast %55 : vector<2x1x128xf32> to vector<2x128xf32>
    %cst_15 = arith.constant dense<0.000000e+00> : vector<2x128xf32>
    %57 = tpu.matmul %54, %1, %cst_15 {dimension_numbers = #tpu.dot_dimension_numbers<[1], [0], [0], [1], [0, 0, 1, 1], [], []>} : vector<2x32xf32>, vector<32x128xf32>, vector<2x128xf32> -> vector<2x128xf32>
    %58 = arith.addf %56, %57 : vector<2x128xf32>
    %cst_16 = arith.constant 5.000000e-01 : f32
    %59 = vector.broadcast %cst_16 : f32 to vector<2x128xf32>
    %60 = arith.mulf %59, %58 : vector<2x128xf32>
    %61 = math.tanh %60 : vector<2x128xf32>
    %cst_17 = arith.constant 1.000000e+00 : f32
    %62 = vector.broadcast %cst_17 : f32 to vector<2x128xf32>
    %63 = arith.addf %62, %61 : vector<2x128xf32>
    %cst_18 = arith.constant 5.000000e-01 : f32
    %64 = vector.broadcast %cst_18 : f32 to vector<2x128xf32>
    %65 = arith.mulf %64, %63 : vector<2x128xf32>
    %66 = math.tanh %58 : vector<2x128xf32>
    %67 = vector.extract_strided_slice %65 {offsets = [0, 0], sizes = [2, 32], strides = [1, 1]} : vector<2x128xf32> to vector<2x32xf32>
    %68 = vector.extract_strided_slice %65 {offsets = [0, 32], sizes = [2, 32], strides = [1, 1]} : vector<2x128xf32> to vector<2x32xf32>
    %69 = vector.extract_strided_slice %66 {offsets = [0, 64], sizes = [2, 32], strides = [1, 1]} : vector<2x128xf32> to vector<2x32xf32>
    %70 = vector.extract_strided_slice %65 {offsets = [0, 96], sizes = [2, 32], strides = [1, 1]} : vector<2x128xf32> to vector<2x32xf32>
    %71 = arith.mulf %68, %52 : vector<2x32xf32>
    %72 = arith.mulf %67, %69 : vector<2x32xf32>
    %73 = arith.addf %71, %72 : vector<2x32xf32>
    %74 = math.tanh %73 : vector<2x32xf32>
    %75 = arith.mulf %70, %74 : vector<2x32xf32>
    %76 = vector.extract_strided_slice %10 {offsets = [0, 3, 0], sizes = [2, 1, 128], strides = [1, 1, 1]} : vector<2x8x128xf32> to vector<2x1x128xf32>
    %77 = vector.shape_cast %76 : vector<2x1x128xf32> to vector<2x128xf32>
    %cst_19 = arith.constant dense<0.000000e+00> : vector<2x128xf32>
    %78 = tpu.matmul %75, %1, %cst_19 {dimension_numbers = #tpu.dot_dimension_numbers<[1], [0], [0], [1], [0, 0, 1, 1], [], []>} : vector<2x32xf32>, vector<32x128xf32>, vector<2x128xf32> -> vector<2x128xf32>
    %79 = arith.addf %77, %78 : vector<2x128xf32>
    %cst_20 = arith.constant 5.000000e-01 : f32
    %80 = vector.broadcast %cst_20 : f32 to vector<2x128xf32>
    %81 = arith.mulf %80, %79 : vector<2x128xf32>
    %82 = math.tanh %81 : vector<2x128xf32>
    %cst_21 = arith.constant 1.000000e+00 : f32
    %83 = vector.broadcast %cst_21 : f32 to vector<2x128xf32>
    %84 = arith.addf %83, %82 : vector<2x128xf32>
    %cst_22 = arith.constant 5.000000e-01 : f32
    %85 = vector.broadcast %cst_22 : f32 to vector<2x128xf32>
    %86 = arith.mulf %85, %84 : vector<2x128xf32>
    %87 = math.tanh %79 : vector<2x128xf32>
    %88 = vector.extract_strided_slice %86 {offsets = [0, 0], sizes = [2, 32], strides = [1, 1]} : vector<2x128xf32> to vector<2x32xf32>
    %89 = vector.extract_strided_slice %86 {offsets = [0, 32], sizes = [2, 32], strides = [1, 1]} : vector<2x128xf32> to vector<2x32xf32>
    %90 = vector.extract_strided_slice %87 {offsets = [0, 64], sizes = [2, 32], strides = [1, 1]} : vector<2x128xf32> to vector<2x32xf32>
    %91 = vector.extract_strided_slice %86 {offsets = [0, 96], sizes = [2, 32], strides = [1, 1]} : vector<2x128xf32> to vector<2x32xf32>
    %92 = arith.mulf %89, %73 : vector<2x32xf32>
    %93 = arith.mulf %88, %90 : vector<2x32xf32>
    %94 = arith.addf %92, %93 : vector<2x32xf32>
    %95 = math.tanh %94 : vector<2x32xf32>
    %96 = arith.mulf %91, %95 : vector<2x32xf32>
    %97 = vector.extract_strided_slice %10 {offsets = [0, 4, 0], sizes = [2, 1, 128], strides = [1, 1, 1]} : vector<2x8x128xf32> to vector<2x1x128xf32>
    %98 = vector.shape_cast %97 : vector<2x1x128xf32> to vector<2x128xf32>
    %cst_23 = arith.constant dense<0.000000e+00> : vector<2x128xf32>
    %99 = tpu.matmul %96, %1, %cst_23 {dimension_numbers = #tpu.dot_dimension_numbers<[1], [0], [0], [1], [0, 0, 1, 1], [], []>} : vector<2x32xf32>, vector<32x128xf32>, vector<2x128xf32> -> vector<2x128xf32>
    %100 = arith.addf %98, %99 : vector<2x128xf32>
    %cst_24 = arith.constant 5.000000e-01 : f32
    %101 = vector.broadcast %cst_24 : f32 to vector<2x128xf32>
    %102 = arith.mulf %101, %100 : vector<2x128xf32>
    %103 = math.tanh %102 : vector<2x128xf32>
    %cst_25 = arith.constant 1.000000e+00 : f32
    %104 = vector.broadcast %cst_25 : f32 to vector<2x128xf32>
    %105 = arith.addf %104, %103 : vector<2x128xf32>
    %cst_26 = arith.constant 5.000000e-01 : f32
    %106 = vector.broadcast %cst_26 : f32 to vector<2x128xf32>
    %107 = arith.mulf %106, %105 : vector<2x128xf32>
    %108 = math.tanh %100 : vector<2x128xf32>
    %109 = vector.extract_strided_slice %107 {offsets = [0, 0], sizes = [2, 32], strides = [1, 1]} : vector<2x128xf32> to vector<2x32xf32>
    %110 = vector.extract_strided_slice %107 {offsets = [0, 32], sizes = [2, 32], strides = [1, 1]} : vector<2x128xf32> to vector<2x32xf32>
    %111 = vector.extract_strided_slice %108 {offsets = [0, 64], sizes = [2, 32], strides = [1, 1]} : vector<2x128xf32> to vector<2x32xf32>
    %112 = vector.extract_strided_slice %107 {offsets = [0, 96], sizes = [2, 32], strides = [1, 1]} : vector<2x128xf32> to vector<2x32xf32>
    %113 = arith.mulf %110, %94 : vector<2x32xf32>
    %114 = arith.mulf %109, %111 : vector<2x32xf32>
    %115 = arith.addf %113, %114 : vector<2x32xf32>
    %116 = math.tanh %115 : vector<2x32xf32>
    %117 = arith.mulf %112, %116 : vector<2x32xf32>
    %118 = vector.extract_strided_slice %10 {offsets = [0, 5, 0], sizes = [2, 1, 128], strides = [1, 1, 1]} : vector<2x8x128xf32> to vector<2x1x128xf32>
    %119 = vector.shape_cast %118 : vector<2x1x128xf32> to vector<2x128xf32>
    %cst_27 = arith.constant dense<0.000000e+00> : vector<2x128xf32>
    %120 = tpu.matmul %117, %1, %cst_27 {dimension_numbers = #tpu.dot_dimension_numbers<[1], [0], [0], [1], [0, 0, 1, 1], [], []>} : vector<2x32xf32>, vector<32x128xf32>, vector<2x128xf32> -> vector<2x128xf32>
    %121 = arith.addf %119, %120 : vector<2x128xf32>
    %cst_28 = arith.constant 5.000000e-01 : f32
    %122 = vector.broadcast %cst_28 : f32 to vector<2x128xf32>
    %123 = arith.mulf %122, %121 : vector<2x128xf32>
    %124 = math.tanh %123 : vector<2x128xf32>
    %cst_29 = arith.constant 1.000000e+00 : f32
    %125 = vector.broadcast %cst_29 : f32 to vector<2x128xf32>
    %126 = arith.addf %125, %124 : vector<2x128xf32>
    %cst_30 = arith.constant 5.000000e-01 : f32
    %127 = vector.broadcast %cst_30 : f32 to vector<2x128xf32>
    %128 = arith.mulf %127, %126 : vector<2x128xf32>
    %129 = math.tanh %121 : vector<2x128xf32>
    %130 = vector.extract_strided_slice %128 {offsets = [0, 0], sizes = [2, 32], strides = [1, 1]} : vector<2x128xf32> to vector<2x32xf32>
    %131 = vector.extract_strided_slice %128 {offsets = [0, 32], sizes = [2, 32], strides = [1, 1]} : vector<2x128xf32> to vector<2x32xf32>
    %132 = vector.extract_strided_slice %129 {offsets = [0, 64], sizes = [2, 32], strides = [1, 1]} : vector<2x128xf32> to vector<2x32xf32>
    %133 = vector.extract_strided_slice %128 {offsets = [0, 96], sizes = [2, 32], strides = [1, 1]} : vector<2x128xf32> to vector<2x32xf32>
    %134 = arith.mulf %131, %115 : vector<2x32xf32>
    %135 = arith.mulf %130, %132 : vector<2x32xf32>
    %136 = arith.addf %134, %135 : vector<2x32xf32>
    %137 = math.tanh %136 : vector<2x32xf32>
    %138 = arith.mulf %133, %137 : vector<2x32xf32>
    %139 = vector.extract_strided_slice %10 {offsets = [0, 6, 0], sizes = [2, 1, 128], strides = [1, 1, 1]} : vector<2x8x128xf32> to vector<2x1x128xf32>
    %140 = vector.shape_cast %139 : vector<2x1x128xf32> to vector<2x128xf32>
    %cst_31 = arith.constant dense<0.000000e+00> : vector<2x128xf32>
    %141 = tpu.matmul %138, %1, %cst_31 {dimension_numbers = #tpu.dot_dimension_numbers<[1], [0], [0], [1], [0, 0, 1, 1], [], []>} : vector<2x32xf32>, vector<32x128xf32>, vector<2x128xf32> -> vector<2x128xf32>
    %142 = arith.addf %140, %141 : vector<2x128xf32>
    %cst_32 = arith.constant 5.000000e-01 : f32
    %143 = vector.broadcast %cst_32 : f32 to vector<2x128xf32>
    %144 = arith.mulf %143, %142 : vector<2x128xf32>
    %145 = math.tanh %144 : vector<2x128xf32>
    %cst_33 = arith.constant 1.000000e+00 : f32
    %146 = vector.broadcast %cst_33 : f32 to vector<2x128xf32>
    %147 = arith.addf %146, %145 : vector<2x128xf32>
    %cst_34 = arith.constant 5.000000e-01 : f32
    %148 = vector.broadcast %cst_34 : f32 to vector<2x128xf32>
    %149 = arith.mulf %148, %147 : vector<2x128xf32>
    %150 = math.tanh %142 : vector<2x128xf32>
    %151 = vector.extract_strided_slice %149 {offsets = [0, 0], sizes = [2, 32], strides = [1, 1]} : vector<2x128xf32> to vector<2x32xf32>
    %152 = vector.extract_strided_slice %149 {offsets = [0, 32], sizes = [2, 32], strides = [1, 1]} : vector<2x128xf32> to vector<2x32xf32>
    %153 = vector.extract_strided_slice %150 {offsets = [0, 64], sizes = [2, 32], strides = [1, 1]} : vector<2x128xf32> to vector<2x32xf32>
    %154 = vector.extract_strided_slice %149 {offsets = [0, 96], sizes = [2, 32], strides = [1, 1]} : vector<2x128xf32> to vector<2x32xf32>
    %155 = arith.mulf %152, %136 : vector<2x32xf32>
    %156 = arith.mulf %151, %153 : vector<2x32xf32>
    %157 = arith.addf %155, %156 : vector<2x32xf32>
    %158 = math.tanh %157 : vector<2x32xf32>
    %159 = arith.mulf %154, %158 : vector<2x32xf32>
    %160 = vector.extract_strided_slice %10 {offsets = [0, 7, 0], sizes = [2, 1, 128], strides = [1, 1, 1]} : vector<2x8x128xf32> to vector<2x1x128xf32>
    %161 = vector.shape_cast %160 : vector<2x1x128xf32> to vector<2x128xf32>
    %cst_35 = arith.constant dense<0.000000e+00> : vector<2x128xf32>
    %162 = tpu.matmul %159, %1, %cst_35 {dimension_numbers = #tpu.dot_dimension_numbers<[1], [0], [0], [1], [0, 0, 1, 1], [], []>} : vector<2x32xf32>, vector<32x128xf32>, vector<2x128xf32> -> vector<2x128xf32>
    %163 = arith.addf %161, %162 : vector<2x128xf32>
    %cst_36 = arith.constant 5.000000e-01 : f32
    %164 = vector.broadcast %cst_36 : f32 to vector<2x128xf32>
    %165 = arith.mulf %164, %163 : vector<2x128xf32>
    %166 = math.tanh %165 : vector<2x128xf32>
    %cst_37 = arith.constant 1.000000e+00 : f32
    %167 = vector.broadcast %cst_37 : f32 to vector<2x128xf32>
    %168 = arith.addf %167, %166 : vector<2x128xf32>
    %cst_38 = arith.constant 5.000000e-01 : f32
    %169 = vector.broadcast %cst_38 : f32 to vector<2x128xf32>
    %170 = arith.mulf %169, %168 : vector<2x128xf32>
    %171 = math.tanh %163 : vector<2x128xf32>
    %172 = vector.extract_strided_slice %170 {offsets = [0, 0], sizes = [2, 32], strides = [1, 1]} : vector<2x128xf32> to vector<2x32xf32>
    %173 = vector.extract_strided_slice %170 {offsets = [0, 32], sizes = [2, 32], strides = [1, 1]} : vector<2x128xf32> to vector<2x32xf32>
    %174 = vector.extract_strided_slice %171 {offsets = [0, 64], sizes = [2, 32], strides = [1, 1]} : vector<2x128xf32> to vector<2x32xf32>
    %175 = vector.extract_strided_slice %170 {offsets = [0, 96], sizes = [2, 32], strides = [1, 1]} : vector<2x128xf32> to vector<2x32xf32>
    %176 = arith.mulf %173, %157 : vector<2x32xf32>
    %177 = arith.mulf %172, %174 : vector<2x32xf32>
    %178 = arith.addf %176, %177 : vector<2x32xf32>
    %179 = math.tanh %178 : vector<2x32xf32>
    %180 = arith.mulf %175, %179 : vector<2x32xf32>
    %181 = tpu.concatenate %33, %54, %75, %96, %117, %138, %159, %180 in 0 : vector<2x32xf32>, vector<2x32xf32>, vector<2x32xf32>, vector<2x32xf32>, vector<2x32xf32>, vector<2x32xf32>, vector<2x32xf32>, vector<2x32xf32> -> vector<16x32xf32>
    %cst_39 = arith.constant dense<0.000000e+00> : vector<16x128xf32>
    %182 = tpu.matmul %181, %2, %cst_39 {dimension_numbers = #tpu.dot_dimension_numbers<[1], [0], [0], [1], [0, 0, 1, 1], [], []>} : vector<16x32xf32>, vector<32x128xf32>, vector<16x128xf32> -> vector<16x128xf32>
    %183 = vector.broadcast %5 : vector<1x128xf32> to vector<16x128xf32>
    %184 = arith.addf %182, %183 : vector<16x128xf32>
    %185 = vector.extract_strided_slice %184 {offsets = [0, 0], sizes = [2, 128], strides = [1, 1]} : vector<16x128xf32> to vector<2x128xf32>
    %c0_40 = arith.constant 0 : index
    %c0_41 = arith.constant 0 : index
    %c0_42 = arith.constant 0 : index
    %186 = vector.load %arg4[%c0_40, %c0_41, %c0_42] : memref<2x8x128xf32, #tpu.memory_space<vmem>>, vector<2x1x128xf32>
    %187 = vector.shape_cast %186 : vector<2x1x128xf32> to vector<2x128xf32>
    %188 = vector.shape_cast %185 : vector<2x128xf32> to vector<2x1x128xf32>
    tpu.vector_store %arg4[%c0_40, %c0_41, %c0_42], %188 {strides = array<i32>} : memref<2x8x128xf32, #tpu.memory_space<vmem>>, vector<2x1x128xf32>,
    %189 = vector.extract_strided_slice %184 {offsets = [2, 0], sizes = [2, 128], strides = [1, 1]} : vector<16x128xf32> to vector<2x128xf32>
    %c0_43 = arith.constant 0 : index
    %c1 = arith.constant 1 : index
    %c0_44 = arith.constant 0 : index
    %190 = vector.load %arg4[%c0_43, %c1, %c0_44] : memref<2x8x128xf32, #tpu.memory_space<vmem>>, vector<2x1x128xf32>
    %191 = vector.shape_cast %190 : vector<2x1x128xf32> to vector<2x128xf32>
    %192 = vector.shape_cast %189 : vector<2x128xf32> to vector<2x1x128xf32>
    tpu.vector_store %arg4[%c0_43, %c1, %c0_44], %192 {strides = array<i32>} : memref<2x8x128xf32, #tpu.memory_space<vmem>>, vector<2x1x128xf32>,
    %193 = vector.extract_strided_slice %184 {offsets = [4, 0], sizes = [2, 128], strides = [1, 1]} : vector<16x128xf32> to vector<2x128xf32>
    %c0_45 = arith.constant 0 : index
    %c2 = arith.constant 2 : index
    %c0_46 = arith.constant 0 : index
    %194 = vector.load %arg4[%c0_45, %c2, %c0_46] : memref<2x8x128xf32, #tpu.memory_space<vmem>>, vector<2x1x128xf32>
    %195 = vector.shape_cast %194 : vector<2x1x128xf32> to vector<2x128xf32>
    %196 = vector.shape_cast %193 : vector<2x128xf32> to vector<2x1x128xf32>
    tpu.vector_store %arg4[%c0_45, %c2, %c0_46], %196 {strides = array<i32>} : memref<2x8x128xf32, #tpu.memory_space<vmem>>, vector<2x1x128xf32>,
    %197 = vector.extract_strided_slice %184 {offsets = [6, 0], sizes = [2, 128], strides = [1, 1]} : vector<16x128xf32> to vector<2x128xf32>
    %c0_47 = arith.constant 0 : index
    %c3 = arith.constant 3 : index
    %c0_48 = arith.constant 0 : index
    %198 = vector.load %arg4[%c0_47, %c3, %c0_48] : memref<2x8x128xf32, #tpu.memory_space<vmem>>, vector<2x1x128xf32>
    %199 = vector.shape_cast %198 : vector<2x1x128xf32> to vector<2x128xf32>
    %200 = vector.shape_cast %197 : vector<2x128xf32> to vector<2x1x128xf32>
    tpu.vector_store %arg4[%c0_47, %c3, %c0_48], %200 {strides = array<i32>} : memref<2x8x128xf32, #tpu.memory_space<vmem>>, vector<2x1x128xf32>,
    %201 = vector.extract_strided_slice %184 {offsets = [8, 0], sizes = [2, 128], strides = [1, 1]} : vector<16x128xf32> to vector<2x128xf32>
    %c0_49 = arith.constant 0 : index
    %c4 = arith.constant 4 : index
    %c0_50 = arith.constant 0 : index
    %202 = vector.load %arg4[%c0_49, %c4, %c0_50] : memref<2x8x128xf32, #tpu.memory_space<vmem>>, vector<2x1x128xf32>
    %203 = vector.shape_cast %202 : vector<2x1x128xf32> to vector<2x128xf32>
    %204 = vector.shape_cast %201 : vector<2x128xf32> to vector<2x1x128xf32>
    tpu.vector_store %arg4[%c0_49, %c4, %c0_50], %204 {strides = array<i32>} : memref<2x8x128xf32, #tpu.memory_space<vmem>>, vector<2x1x128xf32>,
    %205 = vector.extract_strided_slice %184 {offsets = [10, 0], sizes = [2, 128], strides = [1, 1]} : vector<16x128xf32> to vector<2x128xf32>
    %c0_51 = arith.constant 0 : index
    %c5 = arith.constant 5 : index
    %c0_52 = arith.constant 0 : index
    %206 = vector.load %arg4[%c0_51, %c5, %c0_52] : memref<2x8x128xf32, #tpu.memory_space<vmem>>, vector<2x1x128xf32>
    %207 = vector.shape_cast %206 : vector<2x1x128xf32> to vector<2x128xf32>
    %208 = vector.shape_cast %205 : vector<2x128xf32> to vector<2x1x128xf32>
    tpu.vector_store %arg4[%c0_51, %c5, %c0_52], %208 {strides = array<i32>} : memref<2x8x128xf32, #tpu.memory_space<vmem>>, vector<2x1x128xf32>,
    %209 = vector.extract_strided_slice %184 {offsets = [12, 0], sizes = [2, 128], strides = [1, 1]} : vector<16x128xf32> to vector<2x128xf32>
    %c0_53 = arith.constant 0 : index
    %c6 = arith.constant 6 : index
    %c0_54 = arith.constant 0 : index
    %210 = vector.load %arg4[%c0_53, %c6, %c0_54] : memref<2x8x128xf32, #tpu.memory_space<vmem>>, vector<2x1x128xf32>
    %211 = vector.shape_cast %210 : vector<2x1x128xf32> to vector<2x128xf32>
    %212 = vector.shape_cast %209 : vector<2x128xf32> to vector<2x1x128xf32>
    tpu.vector_store %arg4[%c0_53, %c6, %c0_54], %212 {strides = array<i32>} : memref<2x8x128xf32, #tpu.memory_space<vmem>>, vector<2x1x128xf32>,
    %213 = vector.extract_strided_slice %184 {offsets = [14, 0], sizes = [2, 128], strides = [1, 1]} : vector<16x128xf32> to vector<2x128xf32>
    %c0_55 = arith.constant 0 : index
    %c7 = arith.constant 7 : index
    %c0_56 = arith.constant 0 : index
    %214 = vector.load %arg4[%c0_55, %c7, %c0_56] : memref<2x8x128xf32, #tpu.memory_space<vmem>>, vector<2x1x128xf32>
    %215 = vector.shape_cast %214 : vector<2x1x128xf32> to vector<2x128xf32>
    %216 = vector.shape_cast %213 : vector<2x128xf32> to vector<2x1x128xf32>
    tpu.vector_store %arg4[%c0_55, %c7, %c0_56], %216 {strides = array<i32>} : memref<2x8x128xf32, #tpu.memory_space<vmem>>, vector<2x1x128xf32>,
    %c0_57 = arith.constant 0 : index
    %c0_58 = arith.constant 0 : index
    %217 = vector.load %arg5[%c0_57, %c0_58] : memref<2x32xf32, #tpu.memory_space<vmem>>, vector<2x32xf32>
    tpu.vector_store %arg5[%c0_57, %c0_58], %180 {strides = array<i32>} : memref<2x32xf32, #tpu.memory_space<vmem>>, vector<2x32xf32>,
    %c0_59 = arith.constant 0 : index
    %c0_60 = arith.constant 0 : index
    %218 = vector.load %arg6[%c0_59, %c0_60] : memref<2x32xf32, #tpu.memory_space<vmem>>, vector<2x32xf32>
    tpu.vector_store %arg6[%c0_59, %c0_60], %178 {strides = array<i32>} : memref<2x32xf32, #tpu.memory_space<vmem>>, vector<2x32xf32>,
    return
  }
}

</mosaic_0001>

<llo_original>
// kernel: decoder_forward.1
$region0: #{decoder_forward.1}
  #allocation0 [shape = 'u32[]', space=smem, size = 0x4, offset = 0x4, fixed_abs, tag = 'smem constant byte address 0x4 - core index']
  #allocation1 [shape = 'u32[144,128]{1,0:T(1,128)}', space=vmem, size = 0x12000, scoped, tag = 'internal scratch']
  %s0 = inlined_call_operand.vmem [shape: f32[16,4], index: 0, kind: input, shape index: {}]
  %s1 = inlined_call_operand.vmem [shape: f32[2,32], index: 1, kind: input, shape index: {}]
  %s2 = inlined_call_operand.vmem [shape: f32[2,32], index: 2, kind: input, shape index: {}]
  %s3 = inlined_call_operand.hbm [shape: f32[80,128], index: 3, kind: input, shape index: {}]
  %s4 = inlined_call_operand.vmem [shape: f32[2,8,128], index: 4, kind: output, shape index: {0}]
  %s5 = inlined_call_operand.hbm [shape: f32[2,32], index: 5, kind: output, shape index: {1}]
  %s6 = inlined_call_operand.hbm [shape: f32[2,32], index: 6, kind: output, shape index: {2}]
  %7 = xla_tuple %s4, %s5, %s6
  %s8 = sld [smem:[#allocation0]]
  $region46: #{decoder_forward.1} parent=0
    _
  %s10 = ssub.s32 1, %s8
  %s11 = scalar_select 0, %s10, %s8
  $region1: #{decoder_forward.1} parent=0
    #allocation2 [shape = 'u8[40960]{0}', space=vmem, size = 0xa000, scoped, tag = 'input window, operand 3, single buffered']
    #allocation3 [shape = 's32[1]{0}', space=sflag, size = 0x4, scoped, tag = 'scoped memory for decoder_forward.1']
    #allocation4 [shape = 's32[1]{0}', space=sflag, size = 0x4, scoped, tag = 'scoped memory for decoder_forward.1']
    #allocation5 [shape = 'u8[1024]{0}', space=vmem, size = 0x400, scoped, tag = 'output window, operand 1, single buffered']
    #allocation6 [shape = 'u8[1024]{0}', space=vmem, size = 0x400, scoped, tag = 'output window, operand 2, single buffered']
    #allocation7 [shape = 's32[1]{0}', space=sflag, size = 0x4, scoped, tag = 'scoped memory for decoder_forward.1']
    %12 = vsyncpa [#allocation3], 0
    %13 = vsyncpa [#allocation4], 0
    %14 = vsyncpa [#allocation7], 0
    // Predicated region
    $region2: #{decoder_forward.1} parent=1 // pred_check
      _
    $region3: #{decoder_forward.1} parent=1 // pred_check_branch
      %16 = sbr.rel (0) target = $region5
    $region4: #{decoder_forward.1} parent=1 // pred_region
      _
    $region5: #{decoder_forward.1} parent=1 // pred_fallthru
      _
    // Predicated region
    $region6: #{decoder_forward.1} parent=1 // pred_check
      _
    $region7: #{decoder_forward.1} parent=1 // pred_check_branch
      %18 = sbr.rel (0) target = $region9
    $region8: #{decoder_forward.1} parent=1 // pred_region
      _
    $region9: #{decoder_forward.1} parent=1 // pred_fallthru
      _
    // Predicated region
    $region10: #{decoder_forward.1} parent=1 // pred_check
      _
    $region11: #{decoder_forward.1} parent=1 // pred_check_branch
      %20 = sbr.rel (0) target = $region13
    $region12: #{decoder_forward.1} parent=1 // pred_region
      _
    $region13: #{decoder_forward.1} parent=1 // pred_fallthru
      _
    // Predicated region
    $region14: #{decoder_forward.1} parent=1 // pred_check
      _
    $region15: #{decoder_forward.1} parent=1 // pred_check_branch
      %22 = sbr.rel (0) target = $region17
    $region16: #{decoder_forward.1} parent=1 // pred_region
      %s24 = ssub.s32 1280, 1280
      %25 = vsyncadd [#allocation3], %s24
      %s26 = sshll.u32 [#allocation2], 4
      %s27 = int_to_ptr.vmem [resolvable:$true] %s26
      %32 = dma.hbm_to_vmem [thread:$0]  %s3, 1280, %s27, [#allocation3], 128, 128, 8
    $region17: #{decoder_forward.1} parent=1 // pred_fallthru
      _
    // Predicated region
    $region18: #{decoder_forward.1} parent=1 // pred_check
      _
    $region19: #{decoder_forward.1} parent=1 // pred_check_branch
      %34 = sbr.rel (0) target = $region21
    $region20: #{decoder_forward.1} parent=1 // pred_region
      %35 = dma.done [#allocation3], 1280
    $region21: #{decoder_forward.1} parent=1 // pred_fallthru
      _
    %v36 = vld [vmem:[#allocation2] sm:$0xff]
    %v37 = vld [vmem:[#allocation2 + $0x8] sm:$0xff]
    %v38 = vld [vmem:[#allocation2 + $0x10] sm:$0xff]
    %v39 = vld [vmem:[#allocation2 + $0x18] sm:$0xff]
    %v40 = vld [vmem:[#allocation2 + $0x20] sm:$0xff]
    %v41 = vld [vmem:[#allocation2 + $0x28] sm:$0xff]
    %v42 = vld [vmem:[#allocation2 + $0x30] sm:$0xff]
    %v43 = vld [vmem:[#allocation2 + $0x38] sm:$0xff]
    %v44 = vld [vmem:[#allocation2 + $0x40] sm:$0xff]
    %v45 = vld [vmem:[#allocation2 + $0x48] sm:$0xff]
    %v46 = vld [vmem:[%s0] sm:$0xff]
    %v47 = vld [vmem:[%s0 + $0x8] sm:$0xff]
    %v48 = vlaneseq
    %v49 = vshrl.u32 %v48, 7
    %v50 = vsub.s32 0, %v49
    %v51 = vrot.slane %v45, %v50
    %vm52 = vcmask 31744
    %v54 = vsel %vm52, %v46, 0
    %v57 = vsel %vm52, %v47, 0
    %vm59 = vcmask 1043456
    %v61 = vsel %vm59, %v44, 0
    %63 = vmatprep.subr.mxu0 0.0
    %64 = vmatpush1.msra.mxu0 %v61
    %65 = vmatprep.subr.mxu0 0.0
    %66 = vmatpush1.msra.mxu0 0.0
    %67 = vmatprep.subr.mxu0 0.0
    %68 = vmatpush1.msra.mxu0 0.0
    %69 = vmatprep.subr.mxu0 0.0
    %70 = vmatpush1.msra.mxu0 0.0
    %71 = vmatprep.subr.mxu0 0.0
    %72 = vmatpush1.msra.mxu0 0.0
    %73 = vmatprep.subr.mxu0 0.0
    %74 = vmatpush1.msra.mxu0 0.0
    %75 = vmatprep.subr.mxu0 0.0
    %76 = vmatpush1.msra.mxu0 0.0
    %77 = vmatprep.subr.mxu0 0.0
    %78 = vmatpush1.msra.mxu0 0.0
    %79 = vmatprep.subr.mxu0 0.0
    %80 = vmatpush1.msra.mxu0 0.0
    %81 = vmatprep.subr.mxu0 0.0
    %82 = vmatpush1.msra.mxu0 0.0
    %83 = vmatprep.subr.mxu0 0.0
    %84 = vmatpush1.msra.mxu0 0.0
    %85 = vmatprep.subr.mxu0 0.0
    %86 = vmatpush1.msra.mxu0 0.0
    %87 = vmatprep.subr.mxu0 0.0
    %88 = vmatpush1.msra.mxu0 0.0
    %89 = vmatprep.subr.mxu0 0.0
    %90 = vmatpush1.msra.mxu0 0.0
    %91 = vmatprep.subr.mxu0 0.0
    %92 = vmatpush1.msra.mxu0 0.0
    %93 = vmatprep.subr.mxu0 0.0
    %94 = vmatpush1.msra.mxu0 0.0
    %95 = vmatprep.subr.mxu0 0.0
    %96 = vmatpush1.msra.mxu0 0.0
    %97 = vmatprep.subr.mxu0 0.0
    %98 = vmatpush1.msra.mxu0 0.0
    %99 = vmatprep.subr.mxu0 0.0
    %100 = vmatpush1.msra.mxu0 0.0
    %101 = vmatprep.subr.mxu0 0.0
    %102 = vmatpush1.msra.mxu0 0.0
    %103 = vmatprep.subr.mxu0 0.0
    %104 = vmatpush1.msra.mxu0 0.0
    %105 = vmatprep.subr.mxu0 0.0
    %106 = vmatpush1.msra.mxu0 0.0
    %107 = vmatprep.subr.mxu0 0.0
    %108 = vmatpush1.msra.mxu0 0.0
    %109 = vmatprep.subr.mxu0 0.0
    %110 = vmatpush1.msra.mxu0 0.0
    %111 = vmatprep.subr.mxu0 0.0
    %112 = vmatpush1.msra.mxu0 0.0
    %113 = vmatprep.subr.mxu0 0.0
    %114 = vmatpush1.msra.mxu0 0.0
    %115 = vmatprep.subr.mxu0 0.0
    %116 = vmatpush1.msra.mxu0 0.0
    %117 = vmatprep.subr.mxu0 0.0
    %118 = vmatpush1.msra.mxu0 0.0
    %119 = vmatprep.subr.mxu0 0.0
    %120 = vmatpush1.msra.mxu0 0.0
    %121 = vmatprep.subr.mxu0 0.0
    %122 = vmatpush1.msra.mxu0 0.0
    %123 = vmatprep.subr.mxu0 0.0
    %124 = vmatpush1.msra.mxu0 0.0
    %125 = vmatprep.subr.mxu0 0.0
    %126 = vmatpush1.msra.mxu0 0.0
    %127 = vmatprep.mubr.f32.mxu0 0.0
    %128 = vmatmul.mubr.f32.gmra.mrb[0].mxu0 %v54
    %v129 = vpop.f32.mrb[0].mxu0
    %v130 = vadd.f32 %v51, %v129
    %v131 = vpop.f32.mrb[0].mxu0
    %132 = vmatprep.mubr.f32.mxu0 0.0
    %133 = vmatmul.mubr.f32.gmra.mrb[0].mxu0 %v57
    %v134 = vpop.f32.mrb[0].mxu0
    %v135 = vadd.f32 %v51, %v134
    %v136 = vpop.f32.mrb[0].mxu0
    %137 = vdwg.mxu0
    %v138 = vld [vmem:[%s1] sm:$0x3]
    %v139 = vld [vmem:[%s2] sm:$0x3]
    %vm140 = vcmask 261120
    %v142 = vsel %vm140, %v138, 0
    %144 = vmatprep.subr.mxu0 0.0
    %145 = vmatpush1.msra.mxu0 %v36
    %146 = vmatprep.subr.mxu0 0.0
    %147 = vmatpush1.msra.mxu0 %v37
    %148 = vmatprep.subr.mxu0 0.0
    %149 = vmatpush1.msra.mxu0 %v38
    %150 = vmatprep.subr.mxu0 0.0
    %151 = vmatpush1.msra.mxu0 %v39
    %152 = vmatprep.subr.mxu0 0.0
    %153 = vmatpush1.msra.mxu0 0.0
    %154 = vmatprep.subr.mxu0 0.0
    %155 = vmatpush1.msra.mxu0 0.0
    %156 = vmatprep.subr.mxu0 0.0
    %157 = vmatpush1.msra.mxu0 0.0
    %158 = vmatprep.subr.mxu0 0.0
    %159 = vmatpush1.msra.mxu0 0.0
    %160 = vmatprep.subr.mxu0 0.0
    %161 = vmatpush1.msra.mxu0 0.0
    %162 = vmatprep.subr.mxu0 0.0
    %163 = vmatpush1.msra.mxu0 0.0
    %164 = vmatprep.subr.mxu0 0.0
    %165 = vmatpush1.msra.mxu0 0.0
    %166 = vmatprep.subr.mxu0 0.0
    %167 = vmatpush1.msra.mxu0 0.0
    %168 = vmatprep.subr.mxu0 0.0
    %169 = vmatpush1.msra.mxu0 0.0
    %170 = vmatprep.subr.mxu0 0.0
    %171 = vmatpush1.msra.mxu0 0.0
    %172 = vmatprep.subr.mxu0 0.0
    %173 = vmatpush1.msra.mxu0 0.0
    %174 = vmatprep.subr.mxu0 0.0
    %175 = vmatpush1.msra.mxu0 0.0
    %176 = vmatprep.subr.mxu0 0.0
    %177 = vmatpush1.msra.mxu0 0.0
    %178 = vmatprep.subr.mxu0 0.0
    %179 = vmatpush1.msra.mxu0 0.0
    %180 = vmatprep.subr.mxu0 0.0
    %181 = vmatpush1.msra.mxu0 0.0
    %182 = vmatprep.subr.mxu0 0.0
    %183 = vmatpush1.msra.mxu0 0.0
    %184 = vmatprep.subr.mxu0 0.0
    %185 = vmatpush1.msra.mxu0 0.0
    %186 = vmatprep.subr.mxu0 0.0
    %187 = vmatpush1.msra.mxu0 0.0
    %188 = vmatprep.subr.mxu0 0.0
    %189 = vmatpush1.msra.mxu0 0.0
    %190 = vmatprep.subr.mxu0 0.0
    %191 = vmatpush1.msra.mxu0 0.0
    %192 = vmatprep.subr.mxu0 0.0
    %193 = vmatpush1.msra.mxu0 0.0
    %194 = vmatprep.subr.mxu0 0.0
    %195 = vmatpush1.msra.mxu0 0.0
    %196 = vmatprep.subr.mxu0 0.0
    %197 = vmatpush1.msra.mxu0 0.0
    %198 = vmatprep.subr.mxu0 0.0
    %199 = vmatpush1.msra.mxu0 0.0
    %200 = vmatprep.subr.mxu0 0.0
    %201 = vmatpush1.msra.mxu0 0.0
    %202 = vmatprep.subr.mxu0 0.0
    %203 = vmatpush1.msra.mxu0 0.0
    %204 = vmatprep.subr.mxu0 0.0
    %205 = vmatpush1.msra.mxu0 0.0
    %206 = vmatprep.subr.mxu0 0.0
    %207 = vmatpush1.msra.mxu0 0.0
    %208 = vmatprep.mubr.f32.mxu0 0.0
    %209 = vmatmul.mubr.f32.gmra.mrb[0].mxu0 %v142
    %v210 = vpop.f32.mrb[0].mxu0
    %v211 = vadd.f32 0.0, %v210
    %v212 = vpop.f32.mrb[0].mxu0
    %213 = vdwg.mxu0
    %v215 = vrot.slane %v211, 1
    %v218 = vadd.f32 %v130, %v211
    %v219 = vadd.f32 %v135, %v215
    %v220 = vmul.f32 %v218, 0.5
    %v221 = vmul.f32 %v219, 0.5
    %v222 = vtanh.pop %v220
    %v223 = vtanh.pop %v221
    %v224 = vadd.f32 %v222, 1.0
    %v225 = vadd.f32 %v223, 1.0
    %v226 = vmul.f32 %v224, 0.5
    %v227 = vmul.f32 %v225, 0.5
    %v228 = vtanh.pop %v218
    %v229 = vtanh.pop %v219
    %v231 = vrot.slane %v139, 1
    %232 = vrot.lane.b32.xlu0 %v139, 32
    %v233 = vpop.permute.xlu0 %232
    %234 = vrot.lane.b32.xlu0 %v231, 32
    %v235 = vpop.permute.xlu0 %234
    %v238 = vmul.f32 %v226, %v233
    %v239 = vmul.f32 %v227, %v235
    %242 = vrot.lane.b32.xlu0 %v228, 64
    %v243 = vpop.permute.xlu0 %242
    %244 = vrot.lane.b32.xlu0 %v229, 64
    %v245 = vpop.permute.xlu0 %244
    %v248 = vmul.f32 %v226, %v243
    %v249 = vmul.f32 %v227, %v245
    %252 = vrot.lane.b32.xlu0 %v248, 32
    %v253 = vpop.permute.xlu0 %252
    %254 = vrot.lane.b32.xlu0 %v249, 32
    %v255 = vpop.permute.xlu0 %254
    %v258 = vadd.f32 %v238, %v253
    %v259 = vadd.f32 %v239, %v255
    %v260 = vtanh.pop %v258
    %v261 = vtanh.pop %v259
    %264 = vrot.lane.b32.xlu0 %v260, 64
    %v265 = vpop.permute.xlu0 %264
    %266 = vrot.lane.b32.xlu0 %v261, 64
    %v267 = vpop.permute.xlu0 %266
    %v270 = vmul.f32 %v226, %v265
    %v271 = vmul.f32 %v227, %v267
    %v274 = vrot.slane %v271, 7
    %vm275 = vcmask 1041409
    %v276 = vsel %vm275, %v274, %v270
    %277 = vrot.lane.b32.xlu0 %v276, 32
    %v278 = vpop.permute.xlu0 %277
    %v279 = vsel %vm140, %v278, 0
    %281 = vmatprep.subr.mxu0 0.0
    %282 = vmatpush1.msra.mxu0 %v36
    %283 = vmatprep.subr.mxu0 0.0
    %284 = vmatpush1.msra.mxu0 %v37
    %285 = vmatprep.subr.mxu0 0.0
    %286 = vmatpush1.msra.mxu0 %v38
    %287 = vmatprep.subr.mxu0 0.0
    %288 = vmatpush1.msra.mxu0 %v39
    %289 = vmatprep.subr.mxu0 0.0
    %290 = vmatpush1.msra.mxu0 0.0
    %291 = vmatprep.subr.mxu0 0.0
    %292 = vmatpush1.msra.mxu0 0.0
    %293 = vmatprep.subr.mxu0 0.0
    %294 = vmatpush1.msra.mxu0 0.0
    %295 = vmatprep.subr.mxu0 0.0
    %296 = vmatpush1.msra.mxu0 0.0
    %297 = vmatprep.subr.mxu0 0.0
    %298 = vmatpush1.msra.mxu0 0.0
    %299 = vmatprep.subr.mxu0 0.0
    %300 = vmatpush1.msra.mxu0 0.0
    %301 = vmatprep.subr.mxu0 0.0
    %302 = vmatpush1.msra.mxu0 0.0
    %303 = vmatprep.subr.mxu0 0.0
    %304 = vmatpush1.msra.mxu0 0.0
    %305 = vmatprep.subr.mxu0 0.0
    %306 = vmatpush1.msra.mxu0 0.0
    %307 = vmatprep.subr.mxu0 0.0
    %308 = vmatpush1.msra.mxu0 0.0
    %309 = vmatprep.subr.mxu0 0.0
    %310 = vmatpush1.msra.mxu0 0.0
    %311 = vmatprep.subr.mxu0 0.0
    %312 = vmatpush1.msra.mxu0 0.0
    %313 = vmatprep.subr.mxu0 0.0
    %314 = vmatpush1.msra.mxu0 0.0
    %315 = vmatprep.subr.mxu0 0.0
    %316 = vmatpush1.msra.mxu0 0.0
    %317 = vmatprep.subr.mxu0 0.0
    %318 = vmatpush1.msra.mxu0 0.0
    %319 = vmatprep.subr.mxu0 0.0
    %320 = vmatpush1.msra.mxu0 0.0
    %321 = vmatprep.subr.mxu0 0.0
    %322 = vmatpush1.msra.mxu0 0.0
    %323 = vmatprep.subr.mxu0 0.0
    %324 = vmatpush1.msra.mxu0 0.0
    %325 = vmatprep.subr.mxu0 0.0
    %326 = vmatpush1.msra.mxu0 0.0
    %327 = vmatprep.subr.mxu0 0.0
    %328 = vmatpush1.msra.mxu0 0.0
    %329 = vmatprep.subr.mxu0 0.0
    %330 = vmatpush1.msra.mxu0 0.0
    %331 = vmatprep.subr.mxu0 0.0
    %332 = vmatpush1.msra.mxu0 0.0
    %333 = vmatprep.subr.mxu0 0.0
    %334 = vmatpush1.msra.mxu0 0.0
    %335 = vmatprep.subr.mxu0 0.0
    %336 = vmatpush1.msra.mxu0 0.0
    %337 = vmatprep.subr.mxu0 0.0
    %338 = vmatpush1.msra.mxu0 0.0
    %339 = vmatprep.subr.mxu0 0.0
    %340 = vmatpush1.msra.mxu0 0.0
    %341 = vmatprep.subr.mxu0 0.0
    %342 = vmatpush1.msra.mxu0 0.0
    %343 = vmatprep.subr.mxu0 0.0
    %344 = vmatpush1.msra.mxu0 0.0
    %345 = vmatprep.mubr.f32.mxu0 0.0
    %346 = vmatmul.mubr.f32.gmra.mrb[0].mxu0 %v279
    %v347 = vpop.f32.mrb[0].mxu0
    %v348 = vadd.f32 0.0, %v347
    %v349 = vpop.f32.mrb[0].mxu0
    %350 = vdwg.mxu0
    %v352 = vrot.slane %v348, 7
    %v355 = vadd.f32 %v130, %v352
    %v356 = vadd.f32 %v135, %v348
    %v357 = vmul.f32 %v355, 0.5
    %v358 = vmul.f32 %v356, 0.5
    %v359 = vtanh.pop %v357
    %v360 = vtanh.pop %v358
    %v361 = vadd.f32 %v359, 1.0
    %v362 = vadd.f32 %v360, 1.0
    %v363 = vmul.f32 %v361, 0.5
    %v364 = vmul.f32 %v362, 0.5
    %v365 = vtanh.pop %v355
    %v366 = vtanh.pop %v356
    %v369 = vrot.slane %v258, 7
    %v370 = vrot.slane %v259, 7
    %v373 = vmul.f32 %v363, %v369
    %v374 = vmul.f32 %v364, %v370
    %377 = vrot.lane.b32.xlu0 %v365, 64
    %v378 = vpop.permute.xlu0 %377
    %379 = vrot.lane.b32.xlu0 %v366, 64
    %v380 = vpop.permute.xlu0 %379
    %v383 = vmul.f32 %v363, %v378
    %v384 = vmul.f32 %v364, %v380
    %387 = vrot.lane.b32.xlu0 %v383, 32
    %v388 = vpop.permute.xlu0 %387
    %389 = vrot.lane.b32.xlu0 %v384, 32
    %v390 = vpop.permute.xlu0 %389
    %v393 = vadd.f32 %v373, %v388
    %v394 = vadd.f32 %v374, %v390
    %v395 = vtanh.pop %v393
    %v396 = vtanh.pop %v394
    %399 = vrot.lane.b32.xlu0 %v395, 64
    %v400 = vpop.permute.xlu0 %399
    %401 = vrot.lane.b32.xlu0 %v396, 64
    %v402 = vpop.permute.xlu0 %401
    %v405 = vmul.f32 %v363, %v400
    %v406 = vmul.f32 %v364, %v402
    %v409 = vrot.slane %v405, 1
    %v410 = vsel %vm275, %v406, %v409
    %411 = vrot.lane.b32.xlu0 %v410, 32
    %v412 = vpop.permute.xlu0 %411
    %v413 = vsel %vm140, %v412, 0
    %415 = vmatprep.subr.mxu0 0.0
    %416 = vmatpush1.msra.mxu0 %v36
    %417 = vmatprep.subr.mxu0 0.0
    %418 = vmatpush1.msra.mxu0 %v37
    %419 = vmatprep.subr.mxu0 0.0
    %420 = vmatpush1.msra.mxu0 %v38
    %421 = vmatprep.subr.mxu0 0.0
    %422 = vmatpush1.msra.mxu0 %v39
    %423 = vmatprep.subr.mxu0 0.0
    %424 = vmatpush1.msra.mxu0 0.0
    %425 = vmatprep.subr.mxu0 0.0
    %426 = vmatpush1.msra.mxu0 0.0
    %427 = vmatprep.subr.mxu0 0.0
    %428 = vmatpush1.msra.mxu0 0.0
    %429 = vmatprep.subr.mxu0 0.0
    %430 = vmatpush1.msra.mxu0 0.0
    %431 = vmatprep.subr.mxu0 0.0
    %432 = vmatpush1.msra.mxu0 0.0
    %433 = vmatprep.subr.mxu0 0.0
    %434 = vmatpush1.msra.mxu0 0.0
    %435 = vmatprep.subr.mxu0 0.0
    %436 = vmatpush1.msra.mxu0 0.0
    %437 = vmatprep.subr.mxu0 0.0
    %438 = vmatpush1.msra.mxu0 0.0
    %439 = vmatprep.subr.mxu0 0.0
    %440 = vmatpush1.msra.mxu0 0.0
    %441 = vmatprep.subr.mxu0 0.0
    %442 = vmatpush1.msra.mxu0 0.0
    %443 = vmatprep.subr.mxu0 0.0
    %444 = vmatpush1.msra.mxu0 0.0
    %445 = vmatprep.subr.mxu0 0.0
    %446 = vmatpush1.msra.mxu0 0.0
    %447 = vmatprep.subr.mxu0 0.0
    %448 = vmatpush1.msra.mxu0 0.0
    %449 = vmatprep.subr.mxu0 0.0
    %450 = vmatpush1.msra.mxu0 0.0
    %451 = vmatprep.subr.mxu0 0.0
    %452 = vmatpush1.msra.mxu0 0.0
    %453 = vmatprep.subr.mxu0 0.0
    %454 = vmatpush1.msra.mxu0 0.0
    %455 = vmatprep.subr.mxu0 0.0
    %456 = vmatpush1.msra.mxu0 0.0
    %457 = vmatprep.subr.mxu0 0.0
    %458 = vmatpush1.msra.mxu0 0.0
    %459 = vmatprep.subr.mxu0 0.0
    %460 = vmatpush1.msra.mxu0 0.0
    %461 = vmatprep.subr.mxu0 0.0
    %462 = vmatpush1.msra.mxu0 0.0
    %463 = vmatprep.subr.mxu0 0.0
    %464 = vmatpush1.msra.mxu0 0.0
    %465 = vmatprep.subr.mxu0 0.0
    %466 = vmatpush1.msra.mxu0 0.0
    %467 = vmatprep.subr.mxu0 0.0
    %468 = vmatpush1.msra.mxu0 0.0
    %469 = vmatprep.subr.mxu0 0.0
    %470 = vmatpush1.msra.mxu0 0.0
    %471 = vmatprep.subr.mxu0 0.0
    %472 = vmatpush1.msra.mxu0 0.0
    %473 = vmatprep.subr.mxu0 0.0
    %474 = vmatpush1.msra.mxu0 0.0
    %475 = vmatprep.subr.mxu0 0.0
    %476 = vmatpush1.msra.mxu0 0.0
    %477 = vmatprep.subr.mxu0 0.0
    %478 = vmatpush1.msra.mxu0 0.0
    %479 = vmatprep.mubr.f32.mxu0 0.0
    %480 = vmatmul.mubr.f32.gmra.mrb[0].mxu0 %v413
    %v481 = vpop.f32.mrb[0].mxu0
    %v482 = vadd.f32 0.0, %v481
    %v483 = vpop.f32.mrb[0].mxu0
    %484 = vdwg.mxu0
    %v486 = vrot.slane %v482, 6
    %v487 = vrot.slane %v482, 7
    %v490 = vadd.f32 %v130, %v486
    %v491 = vadd.f32 %v135, %v487
    %v492 = vmul.f32 %v490, 0.5
    %v493 = vmul.f32 %v491, 0.5
    %v494 = vtanh.pop %v492
    %v495 = vtanh.pop %v493
    %v496 = vadd.f32 %v494, 1.0
    %v497 = vadd.f32 %v495, 1.0
    %v498 = vmul.f32 %v496, 0.5
    %v499 = vmul.f32 %v497, 0.5
    %v500 = vtanh.pop %v490
    %v501 = vtanh.pop %v491
    %v504 = vrot.slane %v393, 7
    %v505 = vrot.slane %v394, 7
    %v508 = vmul.f32 %v498, %v504
    %v509 = vmul.f32 %v499, %v505
    %512 = vrot.lane.b32.xlu0 %v500, 64
    %v513 = vpop.permute.xlu0 %512
    %514 = vrot.lane.b32.xlu0 %v501, 64
    %v515 = vpop.permute.xlu0 %514
    %v518 = vmul.f32 %v498, %v513
    %v519 = vmul.f32 %v499, %v515
    %522 = vrot.lane.b32.xlu0 %v518, 32
    %v523 = vpop.permute.xlu0 %522
    %524 = vrot.lane.b32.xlu0 %v519, 32
    %v525 = vpop.permute.xlu0 %524
    %v528 = vadd.f32 %v508, %v523
    %v529 = vadd.f32 %v509, %v525
    %v530 = vtanh.pop %v528
    %v531 = vtanh.pop %v529
    %534 = vrot.lane.b32.xlu0 %v530, 64
    %v535 = vpop.permute.xlu0 %534
    %536 = vrot.lane.b32.xlu0 %v531, 64
    %v537 = vpop.permute.xlu0 %536
    %v540 = vmul.f32 %v498, %v535
    %v541 = vmul.f32 %v499, %v537
    %v544 = vrot.slane %v540, 2
    %v545 = vrot.slane %v541, 1
    %v546 = vsel %vm275, %v545, %v544
    %547 = vrot.lane.b32.xlu0 %v546, 32
    %v548 = vpop.permute.xlu0 %547
    %v549 = vsel %vm140, %v548, 0
    %551 = vmatprep.subr.mxu0 0.0
    %552 = vmatpush1.msra.mxu0 %v36
    %553 = vmatprep.subr.mxu0 0.0
    %554 = vmatpush1.msra.mxu0 %v37
    %555 = vmatprep.subr.mxu0 0.0
    %556 = vmatpush1.msra.mxu0 %v38
    %557 = vmatprep.subr.mxu0 0.0
    %558 = vmatpush1.msra.mxu0 %v39
    %559 = vmatprep.subr.mxu0 0.0
    %560 = vmatpush1.msra.mxu0 0.0
    %561 = vmatprep.subr.mxu0 0.0
    %562 = vmatpush1.msra.mxu0 0.0
    %563 = vmatprep.subr.mxu0 0.0
    %564 = vmatpush1.msra.mxu0 0.0
    %565 = vmatprep.subr.mxu0 0.0
    %566 = vmatpush1.msra.mxu0 0.0
    %567 = vmatprep.subr.mxu0 0.0
    %568 = vmatpush1.msra.mxu0 0.0
    %569 = vmatprep.subr.mxu0 0.0
    %570 = vmatpush1.msra.mxu0 0.0
    %571 = vmatprep.subr.mxu0 0.0
    %572 = vmatpush1.msra.mxu0 0.0
    %573 = vmatprep.subr.mxu0 0.0
    %574 = vmatpush1.msra.mxu0 0.0
    %575 = vmatprep.subr.mxu0 0.0
    %576 = vmatpush1.msra.mxu0 0.0
    %577 = vmatprep.subr.mxu0 0.0
    %578 = vmatpush1.msra.mxu0 0.0
    %579 = vmatprep.subr.mxu0 0.0
    %580 = vmatpush1.msra.mxu0 0.0
    %581 = vmatprep.subr.mxu0 0.0
    %582 = vmatpush1.msra.mxu0 0.0
    %583 = vmatprep.subr.mxu0 0.0
    %584 = vmatpush1.msra.mxu0 0.0
    %585 = vmatprep.subr.mxu0 0.0
    %586 = vmatpush1.msra.mxu0 0.0
    %587 = vmatprep.subr.mxu0 0.0
    %588 = vmatpush1.msra.mxu0 0.0
    %589 = vmatprep.subr.mxu0 0.0
    %590 = vmatpush1.msra.mxu0 0.0
    %591 = vmatprep.subr.mxu0 0.0
    %592 = vmatpush1.msra.mxu0 0.0
    %593 = vmatprep.subr.mxu0 0.0
    %594 = vmatpush1.msra.mxu0 0.0
    %595 = vmatprep.subr.mxu0 0.0
    %596 = vmatpush1.msra.mxu0 0.0
    %597 = vmatprep.subr.mxu0 0.0
    %598 = vmatpush1.msra.mxu0 0.0
    %599 = vmatprep.subr.mxu0 0.0
    %600 = vmatpush1.msra.mxu0 0.0
    %601 = vmatprep.subr.mxu0 0.0
    %602 = vmatpush1.msra.mxu0 0.0
    %603 = vmatprep.subr.mxu0 0.0
    %604 = vmatpush1.msra.mxu0 0.0
    %605 = vmatprep.subr.mxu0 0.0
    %606 = vmatpush1.msra.mxu0 0.0
    %607 = vmatprep.subr.mxu0 0.0
    %608 = vmatpush1.msra.mxu0 0.0
    %609 = vmatprep.subr.mxu0 0.0
    %610 = vmatpush1.msra.mxu0 0.0
    %611 = vmatprep.subr.mxu0 0.0
    %612 = vmatpush1.msra.mxu0 0.0
    %613 = vmatprep.subr.mxu0 0.0
    %614 = vmatpush1.msra.mxu0 0.0
    %615 = vmatprep.mubr.f32.mxu0 0.0
    %616 = vmatmul.mubr.f32.gmra.mrb[0].mxu0 %v549
    %v617 = vpop.f32.mrb[0].mxu0
    %v618 = vadd.f32 0.0, %v617
    %v619 = vpop.f32.mrb[0].mxu0
    %620 = vdwg.mxu0
    %v622 = vrot.slane %v618, 5
    %v623 = vrot.slane %v618, 6
    %v626 = vadd.f32 %v130, %v622
    %v627 = vadd.f32 %v135, %v623
    %v628 = vmul.f32 %v626, 0.5
    %v629 = vmul.f32 %v627, 0.5
    %v630 = vtanh.pop %v628
    %v631 = vtanh.pop %v629
    %v632 = vadd.f32 %v630, 1.0
    %v633 = vadd.f32 %v631, 1.0
    %v634 = vmul.f32 %v632, 0.5
    %v635 = vmul.f32 %v633, 0.5
    %v636 = vtanh.pop %v626
    %v637 = vtanh.pop %v627
    %v640 = vrot.slane %v528, 7
    %v641 = vrot.slane %v529, 7
    %v644 = vmul.f32 %v634, %v640
    %v645 = vmul.f32 %v635, %v641
    %648 = vrot.lane.b32.xlu0 %v636, 64
    %v649 = vpop.permute.xlu0 %648
    %650 = vrot.lane.b32.xlu0 %v637, 64
    %v651 = vpop.permute.xlu0 %650
    %v654 = vmul.f32 %v634, %v649
    %v655 = vmul.f32 %v635, %v651
    %658 = vrot.lane.b32.xlu0 %v654, 32
    %v659 = vpop.permute.xlu0 %658
    %660 = vrot.lane.b32.xlu0 %v655, 32
    %v661 = vpop.permute.xlu0 %660
    %v664 = vadd.f32 %v644, %v659
    %v665 = vadd.f32 %v645, %v661
    %v666 = vtanh.pop %v664
    %v667 = vtanh.pop %v665
    %670 = vrot.lane.b32.xlu0 %v666, 64
    %v671 = vpop.permute.xlu0 %670
    %672 = vrot.lane.b32.xlu0 %v667, 64
    %v673 = vpop.permute.xlu0 %672
    %v676 = vmul.f32 %v634, %v671
    %v677 = vmul.f32 %v635, %v673
    %v680 = vrot.slane %v676, 3
    %v681 = vrot.slane %v677, 2
    %v682 = vsel %vm275, %v681, %v680
    %683 = vrot.lane.b32.xlu0 %v682, 32
    %v684 = vpop.permute.xlu0 %683
    %v685 = vsel %vm140, %v684, 0
    %687 = vmatprep.subr.mxu0 0.0
    %688 = vmatpush1.msra.mxu0 %v36
    %689 = vmatprep.subr.mxu0 0.0
    %690 = vmatpush1.msra.mxu0 %v37
    %691 = vmatprep.subr.mxu0 0.0
    %692 = vmatpush1.msra.mxu0 %v38
    %693 = vmatprep.subr.mxu0 0.0
    %694 = vmatpush1.msra.mxu0 %v39
    %695 = vmatprep.subr.mxu0 0.0
    %696 = vmatpush1.msra.mxu0 0.0
    %697 = vmatprep.subr.mxu0 0.0
    %698 = vmatpush1.msra.mxu0 0.0
    %699 = vmatprep.subr.mxu0 0.0
    %700 = vmatpush1.msra.mxu0 0.0
    %701 = vmatprep.subr.mxu0 0.0
    %702 = vmatpush1.msra.mxu0 0.0
    %703 = vmatprep.subr.mxu0 0.0
    %704 = vmatpush1.msra.mxu0 0.0
    %705 = vmatprep.subr.mxu0 0.0
    %706 = vmatpush1.msra.mxu0 0.0
    %707 = vmatprep.subr.mxu0 0.0
    %708 = vmatpush1.msra.mxu0 0.0
    %709 = vmatprep.subr.mxu0 0.0
    %710 = vmatpush1.msra.mxu0 0.0
    %711 = vmatprep.subr.mxu0 0.0
    %712 = vmatpush1.msra.mxu0 0.0
    %713 = vmatprep.subr.mxu0 0.0
    %714 = vmatpush1.msra.mxu0 0.0
    %715 = vmatprep.subr.mxu0 0.0
    %716 = vmatpush1.msra.mxu0 0.0
    %717 = vmatprep.subr.mxu0 0.0
    %718 = vmatpush1.msra.mxu0 0.0
    %719 = vmatprep.subr.mxu0 0.0
    %720 = vmatpush1.msra.mxu0 0.0
    %721 = vmatprep.subr.mxu0 0.0
    %722 = vmatpush1.msra.mxu0 0.0
    %723 = vmatprep.subr.mxu0 0.0
    %724 = vmatpush1.msra.mxu0 0.0
    %725 = vmatprep.subr.mxu0 0.0
    %726 = vmatpush1.msra.mxu0 0.0
    %727 = vmatprep.subr.mxu0 0.0
    %728 = vmatpush1.msra.mxu0 0.0
    %729 = vmatprep.subr.mxu0 0.0
    %730 = vmatpush1.msra.mxu0 0.0
    %731 = vmatprep.subr.mxu0 0.0
    %732 = vmatpush1.msra.mxu0 0.0
    %733 = vmatprep.subr.mxu0 0.0
    %734 = vmatpush1.msra.mxu0 0.0
    %735 = vmatprep.subr.mxu0 0.0
    %736 = vmatpush1.msra.mxu0 0.0
    %737 = vmatprep.subr.mxu0 0.0
    %738 = vmatpush1.msra.mxu0 0.0
    %739 = vmatprep.subr.mxu0 0.0
    %740 = vmatpush1.msra.mxu0 0.0
    %741 = vmatprep.subr.mxu0 0.0
    %742 = vmatpush1.msra.mxu0 0.0
    %743 = vmatprep.subr.mxu0 0.0
    %744 = vmatpush1.msra.mxu0 0.0
    %745 = vmatprep.subr.mxu0 0.0
    %746 = vmatpush1.msra.mxu0 0.0
    %747 = vmatprep.subr.mxu0 0.0
    %748 = vmatpush1.msra.mxu0 0.0
    %749 = vmatprep.subr.mxu0 0.0
    %750 = vmatpush1.msra.mxu0 0.0
    %751 = vmatprep.mubr.f32.mxu0 0.0
    %752 = vmatmul.mubr.f32.gmra.mrb[0].mxu0 %v685
    %v753 = vpop.f32.mrb[0].mxu0
    %v754 = vadd.f32 0.0, %v753
    %v755 = vpop.f32.mrb[0].mxu0
    %756 = vdwg.mxu0
    %v758 = vrot.slane %v754, 4
    %v759 = vrot.slane %v754, 5
    %v762 = vadd.f32 %v130, %v758
    %v763 = vadd.f32 %v135, %v759
    %v764 = vmul.f32 %v762, 0.5
    %v765 = vmul.f32 %v763, 0.5
    %v766 = vtanh.pop %v764
    %v767 = vtanh.pop %v765
    %v768 = vadd.f32 %v766, 1.0
    %v769 = vadd.f32 %v767, 1.0
    %v770 = vmul.f32 %v768, 0.5
    %v771 = vmul.f32 %v769, 0.5
    %v772 = vtanh.pop %v762
    %v773 = vtanh.pop %v763
    %v776 = vrot.slane %v664, 7
    %v777 = vrot.slane %v665, 7
    %v780 = vmul.f32 %v770, %v776
    %v781 = vmul.f32 %v771, %v777
    %784 = vrot.lane.b32.xlu0 %v772, 64
    %v785 = vpop.permute.xlu0 %784
    %786 = vrot.lane.b32.xlu0 %v773, 64
    %v787 = vpop.permute.xlu0 %786
    %v790 = vmul.f32 %v770, %v785
    %v791 = vmul.f32 %v771, %v787
    %794 = vrot.lane.b32.xlu0 %v790, 32
    %v795 = vpop.permute.xlu0 %794
    %796 = vrot.lane.b32.xlu0 %v791, 32
    %v797 = vpop.permute.xlu0 %796
    %v800 = vadd.f32 %v780, %v795
    %v801 = vadd.f32 %v781, %v797
    %v802 = vtanh.pop %v800
    %v803 = vtanh.pop %v801
    %806 = vrot.lane.b32.xlu0 %v802, 64
    %v807 = vpop.permute.xlu0 %806
    %808 = vrot.lane.b32.xlu0 %v803, 64
    %v809 = vpop.permute.xlu0 %808
    %v812 = vmul.f32 %v770, %v807
    %v813 = vmul.f32 %v771, %v809
    %v816 = vrot.slane %v812, 4
    %v817 = vrot.slane %v813, 3
    %v818 = vsel %vm275, %v817, %v816
    %819 = vrot.lane.b32.xlu0 %v818, 32
    %v820 = vpop.permute.xlu0 %819
    %v821 = vsel %vm140, %v820, 0
    %823 = vmatprep.subr.mxu0 0.0
    %824 = vmatpush1.msra.mxu0 %v36
    %825 = vmatprep.subr.mxu0 0.0
    %826 = vmatpush1.msra.mxu0 %v37
    %827 = vmatprep.subr.mxu0 0.0
    %828 = vmatpush1.msra.mxu0 %v38
    %829 = vmatprep.subr.mxu0 0.0
    %830 = vmatpush1.msra.mxu0 %v39
    %831 = vmatprep.subr.mxu0 0.0
    %832 = vmatpush1.msra.mxu0 0.0
    %833 = vmatprep.subr.mxu0 0.0
    %834 = vmatpush1.msra.mxu0 0.0
    %835 = vmatprep.subr.mxu0 0.0
    %836 = vmatpush1.msra.mxu0 0.0
    %837 = vmatprep.subr.mxu0 0.0
    %838 = vmatpush1.msra.mxu0 0.0
    %839 = vmatprep.subr.mxu0 0.0
    %840 = vmatpush1.msra.mxu0 0.0
    %841 = vmatprep.subr.mxu0 0.0
    %842 = vmatpush1.msra.mxu0 0.0
    %843 = vmatprep.subr.mxu0 0.0
    %844 = vmatpush1.msra.mxu0 0.0
    %845 = vmatprep.subr.mxu0 0.0
    %846 = vmatpush1.msra.mxu0 0.0
    %847 = vmatprep.subr.mxu0 0.0
    %848 = vmatpush1.msra.mxu0 0.0
    %849 = vmatprep.subr.mxu0 0.0
    %850 = vmatpush1.msra.mxu0 0.0
    %851 = vmatprep.subr.mxu0 0.0
    %852 = vmatpush1.msra.mxu0 0.0
    %853 = vmatprep.subr.mxu0 0.0
    %854 = vmatpush1.msra.mxu0 0.0
    %855 = vmatprep.subr.mxu0 0.0
    %856 = vmatpush1.msra.mxu0 0.0
    %857 = vmatprep.subr.mxu0 0.0
    %858 = vmatpush1.msra.mxu0 0.0
    %859 = vmatprep.subr.mxu0 0.0
    %860 = vmatpush1.msra.mxu0 0.0
    %861 = vmatprep.subr.mxu0 0.0
    %862 = vmatpush1.msra.mxu0 0.0
    %863 = vmatprep.subr.mxu0 0.0
    %864 = vmatpush1.msra.mxu0 0.0
    %865 = vmatprep.subr.mxu0 0.0
    %866 = vmatpush1.msra.mxu0 0.0
    %867 = vmatprep.subr.mxu0 0.0
    %868 = vmatpush1.msra.mxu0 0.0
    %869 = vmatprep.subr.mxu0 0.0
    %870 = vmatpush1.msra.mxu0 0.0
    %871 = vmatprep.subr.mxu0 0.0
    %872 = vmatpush1.msra.mxu0 0.0
    %873 = vmatprep.subr.mxu0 0.0
    %874 = vmatpush1.msra.mxu0 0.0
    %875 = vmatprep.subr.mxu0 0.0
    %876 = vmatpush1.msra.mxu0 0.0
    %877 = vmatprep.subr.mxu0 0.0
    %878 = vmatpush1.msra.mxu0 0.0
    %879 = vmatprep.subr.mxu0 0.0
    %880 = vmatpush1.msra.mxu0 0.0
    %881 = vmatprep.subr.mxu0 0.0
    %882 = vmatpush1.msra.mxu0 0.0
    %883 = vmatprep.subr.mxu0 0.0
    %884 = vmatpush1.msra.mxu0 0.0
    %885 = vmatprep.subr.mxu0 0.0
    %886 = vmatpush1.msra.mxu0 0.0
    %887 = vmatprep.mubr.f32.mxu0 0.0
    %888 = vmatmul.mubr.f32.gmra.mrb[0].mxu0 %v821
    %v889 = vpop.f32.mrb[0].mxu0
    %v890 = vadd.f32 0.0, %v889
    %v891 = vpop.f32.mrb[0].mxu0
    %892 = vdwg.mxu0
    %v894 = vrot.slane %v890, 3
    %v895 = vrot.slane %v890, 4
    %v898 = vadd.f32 %v130, %v894
    %v899 = vadd.f32 %v135, %v895
    %v900 = vmul.f32 %v898, 0.5
    %v901 = vmul.f32 %v899, 0.5
    %v902 = vtanh.pop %v900
    %v903 = vtanh.pop %v901
    %v904 = vadd.f32 %v902, 1.0
    %v905 = vadd.f32 %v903, 1.0
    %v906 = vmul.f32 %v904, 0.5
    %v907 = vmul.f32 %v905, 0.5
    %v908 = vtanh.pop %v898
    %v909 = vtanh.pop %v899
    %v912 = vrot.slane %v800, 7
    %v913 = vrot.slane %v801, 7
    %v916 = vmul.f32 %v906, %v912
    %v917 = vmul.f32 %v907, %v913
    %920 = vrot.lane.b32.xlu0 %v908, 64
    %v921 = vpop.permute.xlu0 %920
    %922 = vrot.lane.b32.xlu0 %v909, 64
    %v923 = vpop.permute.xlu0 %922
    %v926 = vmul.f32 %v906, %v921
    %v927 = vmul.f32 %v907, %v923
    %930 = vrot.lane.b32.xlu0 %v926, 32
    %v931 = vpop.permute.xlu0 %930
    %932 = vrot.lane.b32.xlu0 %v927, 32
    %v933 = vpop.permute.xlu0 %932
    %v936 = vadd.f32 %v916, %v931
    %v937 = vadd.f32 %v917, %v933
    %v938 = vtanh.pop %v936
    %v939 = vtanh.pop %v937
    %942 = vrot.lane.b32.xlu0 %v938, 64
    %v943 = vpop.permute.xlu0 %942
    %944 = vrot.lane.b32.xlu0 %v939, 64
    %v945 = vpop.permute.xlu0 %944
    %v948 = vmul.f32 %v906, %v943
    %v949 = vmul.f32 %v907, %v945
    %v952 = vrot.slane %v948, 5
    %v953 = vrot.slane %v949, 4
    %v954 = vsel %vm275, %v953, %v952
    %955 = vrot.lane.b32.xlu0 %v954, 32
    %v956 = vpop.permute.xlu0 %955
    %v957 = vsel %vm140, %v956, 0
    %959 = vmatprep.subr.mxu0 0.0
    %960 = vmatpush1.msra.mxu0 %v36
    %961 = vmatprep.subr.mxu0 0.0
    %962 = vmatpush1.msra.mxu0 %v37
    %963 = vmatprep.subr.mxu0 0.0
    %964 = vmatpush1.msra.mxu0 %v38
    %965 = vmatprep.subr.mxu0 0.0
    %966 = vmatpush1.msra.mxu0 %v39
    %967 = vmatprep.subr.mxu0 0.0
    %968 = vmatpush1.msra.mxu0 0.0
    %969 = vmatprep.subr.mxu0 0.0
    %970 = vmatpush1.msra.mxu0 0.0
    %971 = vmatprep.subr.mxu0 0.0
    %972 = vmatpush1.msra.mxu0 0.0
    %973 = vmatprep.subr.mxu0 0.0
    %974 = vmatpush1.msra.mxu0 0.0
    %975 = vmatprep.subr.mxu0 0.0
    %976 = vmatpush1.msra.mxu0 0.0
    %977 = vmatprep.subr.mxu0 0.0
    %978 = vmatpush1.msra.mxu0 0.0
    %979 = vmatprep.subr.mxu0 0.0
    %980 = vmatpush1.msra.mxu0 0.0
    %981 = vmatprep.subr.mxu0 0.0
    %982 = vmatpush1.msra.mxu0 0.0
    %983 = vmatprep.subr.mxu0 0.0
    %984 = vmatpush1.msra.mxu0 0.0
    %985 = vmatprep.subr.mxu0 0.0
    %986 = vmatpush1.msra.mxu0 0.0
    %987 = vmatprep.subr.mxu0 0.0
    %988 = vmatpush1.msra.mxu0 0.0
    %989 = vmatprep.subr.mxu0 0.0
    %990 = vmatpush1.msra.mxu0 0.0
    %991 = vmatprep.subr.mxu0 0.0
    %992 = vmatpush1.msra.mxu0 0.0
    %993 = vmatprep.subr.mxu0 0.0
    %994 = vmatpush1.msra.mxu0 0.0
    %995 = vmatprep.subr.mxu0 0.0
    %996 = vmatpush1.msra.mxu0 0.0
    %997 = vmatprep.subr.mxu0 0.0
    %998 = vmatpush1.msra.mxu0 0.0
    %999 = vmatprep.subr.mxu0 0.0
    %1000 = vmatpush1.msra.mxu0 0.0
    %1001 = vmatprep.subr.mxu0 0.0
    %1002 = vmatpush1.msra.mxu0 0.0
    %1003 = vmatprep.subr.mxu0 0.0
    %1004 = vmatpush1.msra.mxu0 0.0
    %1005 = vmatprep.subr.mxu0 0.0
    %1006 = vmatpush1.msra.mxu0 0.0
    %1007 = vmatprep.subr.mxu0 0.0
    %1008 = vmatpush1.msra.mxu0 0.0
    %1009 = vmatprep.subr.mxu0 0.0
    %1010 = vmatpush1.msra.mxu0 0.0
    %1011 = vmatprep.subr.mxu0 0.0
    %1012 = vmatpush1.msra.mxu0 0.0
    %1013 = vmatprep.subr.mxu0 0.0
    %1014 = vmatpush1.msra.mxu0 0.0
    %1015 = vmatprep.subr.mxu0 0.0
    %1016 = vmatpush1.msra.mxu0 0.0
    %1017 = vmatprep.subr.mxu0 0.0
    %1018 = vmatpush1.msra.mxu0 0.0
    %1019 = vmatprep.subr.mxu0 0.0
    %1020 = vmatpush1.msra.mxu0 0.0
    %1021 = vmatprep.subr.mxu0 0.0
    %1022 = vmatpush1.msra.mxu0 0.0
    %1023 = vmatprep.mubr.f32.mxu0 0.0
    %1024 = vmatmul.mubr.f32.gmra.mrb[0].mxu0 %v957
    %v1025 = vpop.f32.mrb[0].mxu0
    %v1026 = vadd.f32 0.0, %v1025
    %v1027 = vpop.f32.mrb[0].mxu0
    %1028 = vdwg.mxu0
    %v1030 = vrot.slane %v1026, 2
    %v1031 = vrot.slane %v1026, 3
    %v1034 = vadd.f32 %v130, %v1030
    %v1035 = vadd.f32 %v135, %v1031
    %v1036 = vmul.f32 %v1034, 0.5
    %v1037 = vmul.f32 %v1035, 0.5
    %v1038 = vtanh.pop %v1036
    %v1039 = vtanh.pop %v1037
    %v1040 = vadd.f32 %v1038, 1.0
    %v1041 = vadd.f32 %v1039, 1.0
    %v1042 = vmul.f32 %v1040, 0.5
    %v1043 = vmul.f32 %v1041, 0.5
    %v1044 = vtanh.pop %v1034
    %v1045 = vtanh.pop %v1035
    %v1048 = vrot.slane %v936, 7
    %v1049 = vrot.slane %v937, 7
    %v1052 = vmul.f32 %v1042, %v1048
    %v1053 = vmul.f32 %v1043, %v1049
    %1056 = vrot.lane.b32.xlu0 %v1044, 64
    %v1057 = vpop.permute.xlu0 %1056
    %1058 = vrot.lane.b32.xlu0 %v1045, 64
    %v1059 = vpop.permute.xlu0 %1058
    %v1062 = vmul.f32 %v1042, %v1057
    %v1063 = vmul.f32 %v1043, %v1059
    %1066 = vrot.lane.b32.xlu0 %v1062, 32
    %v1067 = vpop.permute.xlu0 %1066
    %1068 = vrot.lane.b32.xlu0 %v1063, 32
    %v1069 = vpop.permute.xlu0 %1068
    %v1072 = vadd.f32 %v1052, %v1067
    %v1073 = vadd.f32 %v1053, %v1069
    %v1074 = vtanh.pop %v1072
    %v1075 = vtanh.pop %v1073
    %1078 = vrot.lane.b32.xlu0 %v1074, 64
    %v1079 = vpop.permute.xlu0 %1078
    %1080 = vrot.lane.b32.xlu0 %v1075, 64
    %v1081 = vpop.permute.xlu0 %1080
    %v1084 = vmul.f32 %v1042, %v1079
    %v1085 = vmul.f32 %v1043, %v1081
    %v1088 = vrot.slane %v1084, 6
    %v1089 = vrot.slane %v1085, 5
    %v1090 = vsel %vm275, %v1089, %v1088
    %1091 = vrot.lane.b32.xlu0 %v1090, 32
    %v1092 = vpop.permute.xlu0 %1091
    %v1093 = vsel %vm140, %v1092, 0
    %1095 = vmatprep.subr.mxu0 0.0
    %1096 = vmatpush1.msra.mxu0 %v36
    %1097 = vmatprep.subr.mxu0 0.0
    %1098 = vmatpush1.msra.mxu0 %v37
    %1099 = vmatprep.subr.mxu0 0.0
    %1100 = vmatpush1.msra.mxu0 %v38
    %1101 = vmatprep.subr.mxu0 0.0
    %1102 = vmatpush1.msra.mxu0 %v39
    %1103 = vmatprep.subr.mxu0 0.0
    %1104 = vmatpush1.msra.mxu0 0.0
    %1105 = vmatprep.subr.mxu0 0.0
    %1106 = vmatpush1.msra.mxu0 0.0
    %1107 = vmatprep.subr.mxu0 0.0
    %1108 = vmatpush1.msra.mxu0 0.0
    %1109 = vmatprep.subr.mxu0 0.0
    %1110 = vmatpush1.msra.mxu0 0.0
    %1111 = vmatprep.subr.mxu0 0.0
    %1112 = vmatpush1.msra.mxu0 0.0
    %1113 = vmatprep.subr.mxu0 0.0
    %1114 = vmatpush1.msra.mxu0 0.0
    %1115 = vmatprep.subr.mxu0 0.0
    %1116 = vmatpush1.msra.mxu0 0.0
    %1117 = vmatprep.subr.mxu0 0.0
    %1118 = vmatpush1.msra.mxu0 0.0
    %1119 = vmatprep.subr.mxu0 0.0
    %1120 = vmatpush1.msra.mxu0 0.0
    %1121 = vmatprep.subr.mxu0 0.0
    %1122 = vmatpush1.msra.mxu0 0.0
    %1123 = vmatprep.subr.mxu0 0.0
    %1124 = vmatpush1.msra.mxu0 0.0
    %1125 = vmatprep.subr.mxu0 0.0
    %1126 = vmatpush1.msra.mxu0 0.0
    %1127 = vmatprep.subr.mxu0 0.0
    %1128 = vmatpush1.msra.mxu0 0.0
    %1129 = vmatprep.subr.mxu0 0.0
    %1130 = vmatpush1.msra.mxu0 0.0
    %1131 = vmatprep.subr.mxu0 0.0
    %1132 = vmatpush1.msra.mxu0 0.0
    %1133 = vmatprep.subr.mxu0 0.0
    %1134 = vmatpush1.msra.mxu0 0.0
    %1135 = vmatprep.subr.mxu0 0.0
    %1136 = vmatpush1.msra.mxu0 0.0
    %1137 = vmatprep.subr.mxu0 0.0
    %1138 = vmatpush1.msra.mxu0 0.0
    %1139 = vmatprep.subr.mxu0 0.0
    %1140 = vmatpush1.msra.mxu0 0.0
    %1141 = vmatprep.subr.mxu0 0.0
    %1142 = vmatpush1.msra.mxu0 0.0
    %1143 = vmatprep.subr.mxu0 0.0
    %1144 = vmatpush1.msra.mxu0 0.0
    %1145 = vmatprep.subr.mxu0 0.0
    %1146 = vmatpush1.msra.mxu0 0.0
    %1147 = vmatprep.subr.mxu0 0.0
    %1148 = vmatpush1.msra.mxu0 0.0
    %1149 = vmatprep.subr.mxu0 0.0
    %1150 = vmatpush1.msra.mxu0 0.0
    %1151 = vmatprep.subr.mxu0 0.0
    %1152 = vmatpush1.msra.mxu0 0.0
    %1153 = vmatprep.subr.mxu0 0.0
    %1154 = vmatpush1.msra.mxu0 0.0
    %1155 = vmatprep.subr.mxu0 0.0
    %1156 = vmatpush1.msra.mxu0 0.0
    %1157 = vmatprep.subr.mxu0 0.0
    %1158 = vmatpush1.msra.mxu0 0.0
    %1159 = vmatprep.mubr.f32.mxu0 0.0
    %1160 = vmatmul.mubr.f32.gmra.mrb[0].mxu0 %v1093
    %v1161 = vpop.f32.mrb[0].mxu0
    %v1162 = vadd.f32 0.0, %v1161
    %v1163 = vpop.f32.mrb[0].mxu0
    %1164 = vdwg.mxu0
    %v1166 = vrot.slane %v1162, 1
    %v1167 = vrot.slane %v1162, 2
    %v1170 = vadd.f32 %v130, %v1166
    %v1171 = vadd.f32 %v135, %v1167
    %v1172 = vmul.f32 %v1170, 0.5
    %v1173 = vmul.f32 %v1171, 0.5
    %v1174 = vtanh.pop %v1172
    %v1175 = vtanh.pop %v1173
    %v1176 = vadd.f32 %v1174, 1.0
    %v1177 = vadd.f32 %v1175, 1.0
    %v1178 = vmul.f32 %v1176, 0.5
    %v1179 = vmul.f32 %v1177, 0.5
    %v1180 = vtanh.pop %v1170
    %v1181 = vtanh.pop %v1171
    %v1184 = vrot.slane %v1072, 7
    %v1185 = vrot.slane %v1073, 7
    %v1188 = vmul.f32 %v1178, %v1184
    %v1189 = vmul.f32 %v1179, %v1185
    %1192 = vrot.lane.b32.xlu0 %v1180, 64
    %v1193 = vpop.permute.xlu0 %1192
    %1194 = vrot.lane.b32.xlu0 %v1181, 64
    %v1195 = vpop.permute.xlu0 %1194
    %v1198 = vmul.f32 %v1178, %v1193
    %v1199 = vmul.f32 %v1179, %v1195
    %1202 = vrot.lane.b32.xlu0 %v1198, 32
    %v1203 = vpop.permute.xlu0 %1202
    %1204 = vrot.lane.b32.xlu0 %v1199, 32
    %v1205 = vpop.permute.xlu0 %1204
    %v1208 = vadd.f32 %v1188, %v1203
    %v1209 = vadd.f32 %v1189, %v1205
    %v1210 = vtanh.pop %v1208
    %v1211 = vtanh.pop %v1209
    %1214 = vrot.lane.b32.xlu0 %v1210, 64
    %v1215 = vpop.permute.xlu0 %1214
    %1216 = vrot.lane.b32.xlu0 %v1211, 64
    %v1217 = vpop.permute.xlu0 %1216
    %v1220 = vmul.f32 %v1178, %v1215
    %v1221 = vmul.f32 %v1179, %v1217
    %v1223 = vrot.slane %v405, 7
    %v1224 = vrot.slane %v406, 6
    %vm1225 = vcmask 1043459
    %v1226 = vsel %vm1225, %v1224, %v1223
    %v1228 = vrot.slane %v540, 6
    %v1229 = vrot.slane %v541, 5
    %vm1230 = vcmask 1045509
    %v1231 = vsel %vm1230, %v1229, %v1228
    %v1233 = vrot.slane %v676, 5
    %v1234 = vrot.slane %v677, 4
    %vm1235 = vcmask 1047559
    %v1236 = vsel %vm1235, %v1234, %v1233
    %v1239 = vrot.slane %v948, 3
    %v1240 = vrot.slane %v949, 2
    %v1241 = vsel %vm1225, %v1240, %v1239
    %v1243 = vrot.slane %v1084, 2
    %v1244 = vrot.slane %v1085, 1
    %v1245 = vsel %vm1230, %v1244, %v1243
    %v1249 = vrot.slane %v1220, 1
    %v1250 = vsel %vm1235, %v1221, %v1249
    %vm1252 = vcmask 1041408
    %v1253 = vsel %vm1252, %v276, %v1226
    %v1254 = vsel %vm59, %v1253, %v1231
    %vm1255 = vcmask 1045504
    %v1256 = vsel %vm1255, %v1254, %v1236
    %v1257 = vsel %vm1252, %v818, %v1241
    %v1258 = vsel %vm59, %v1257, %v1245
    %v1259 = vsel %vm1255, %v1258, %v1250
    %v1260 = vlaneseq
    %v1261 = vshrl.u32 %v1260, 7
    %v1262 = vsub.s32 1, %v1261
    %v1263 = vrot.slane %v45, %v1262
    %1266 = vrot.lane.b32.xlu0 %v1256, 32
    %v1267 = vpop.permute.xlu0 %1266
    %1268 = vrot.lane.b32.xlu0 %v1259, 32
    %v1269 = vpop.permute.xlu0 %1268
    %v1270 = vsel %vm140, %v1267, 0
    %v1272 = vsel %vm140, %v1269, 0
    %1274 = vmatprep.subr.mxu0 0.0
    %1275 = vmatpush1.msra.mxu0 %v40
    %1276 = vmatprep.subr.mxu0 0.0
    %1277 = vmatpush1.msra.mxu0 %v41
    %1278 = vmatprep.subr.mxu0 0.0
    %1279 = vmatpush1.msra.mxu0 %v42
    %1280 = vmatprep.subr.mxu0 0.0
    %1281 = vmatpush1.msra.mxu0 %v43
    %1282 = vmatprep.subr.mxu0 0.0
    %1283 = vmatpush1.msra.mxu0 0.0
    %1284 = vmatprep.subr.mxu0 0.0
    %1285 = vmatpush1.msra.mxu0 0.0
    %1286 = vmatprep.subr.mxu0 0.0
    %1287 = vmatpush1.msra.mxu0 0.0
    %1288 = vmatprep.subr.mxu0 0.0
    %1289 = vmatpush1.msra.mxu0 0.0
    %1290 = vmatprep.subr.mxu0 0.0
    %1291 = vmatpush1.msra.mxu0 0.0
    %1292 = vmatprep.subr.mxu0 0.0
    %1293 = vmatpush1.msra.mxu0 0.0
    %1294 = vmatprep.subr.mxu0 0.0
    %1295 = vmatpush1.msra.mxu0 0.0
    %1296 = vmatprep.subr.mxu0 0.0
    %1297 = vmatpush1.msra.mxu0 0.0
    %1298 = vmatprep.subr.mxu0 0.0
    %1299 = vmatpush1.msra.mxu0 0.0
    %1300 = vmatprep.subr.mxu0 0.0
    %1301 = vmatpush1.msra.mxu0 0.0
    %1302 = vmatprep.subr.mxu0 0.0
    %1303 = vmatpush1.msra.mxu0 0.0
    %1304 = vmatprep.subr.mxu0 0.0
    %1305 = vmatpush1.msra.mxu0 0.0
    %1306 = vmatprep.subr.mxu0 0.0
    %1307 = vmatpush1.msra.mxu0 0.0
    %1308 = vmatprep.subr.mxu0 0.0
    %1309 = vmatpush1.msra.mxu0 0.0
    %1310 = vmatprep.subr.mxu0 0.0
    %1311 = vmatpush1.msra.mxu0 0.0
    %1312 = vmatprep.subr.mxu0 0.0
    %1313 = vmatpush1.msra.mxu0 0.0
    %1314 = vmatprep.subr.mxu0 0.0
    %1315 = vmatpush1.msra.mxu0 0.0
    %1316 = vmatprep.subr.mxu0 0.0
    %1317 = vmatpush1.msra.mxu0 0.0
    %1318 = vmatprep.subr.mxu0 0.0
    %1319 = vmatpush1.msra.mxu0 0.0
    %1320 = vmatprep.subr.mxu0 0.0
    %1321 = vmatpush1.msra.mxu0 0.0
    %1322 = vmatprep.subr.mxu0 0.0
    %1323 = vmatpush1.msra.mxu0 0.0
    %1324 = vmatprep.subr.mxu0 0.0
    %1325 = vmatpush1.msra.mxu0 0.0
    %1326 = vmatprep.subr.mxu0 0.0
    %1327 = vmatpush1.msra.mxu0 0.0
    %1328 = vmatprep.subr.mxu0 0.0
    %1329 = vmatpush1.msra.mxu0 0.0
    %1330 = vmatprep.subr.mxu0 0.0
    %1331 = vmatpush1.msra.mxu0 0.0
    %1332 = vmatprep.subr.mxu0 0.0
    %1333 = vmatpush1.msra.mxu0 0.0
    %1334 = vmatprep.subr.mxu0 0.0
    %1335 = vmatpush1.msra.mxu0 0.0
    %1336 = vmatprep.subr.mxu0 0.0
    %1337 = vmatpush1.msra.mxu0 0.0
    %1338 = vmatprep.mubr.f32.mxu0 0.0
    %1339 = vmatmul.mubr.f32.gmra.mrb[0].mxu0 %v1270
    %v1340 = vpop.f32.mrb[0].mxu0
    %v1341 = vadd.f32 %v1263, %v1340
    %v1342 = vpop.f32.mrb[0].mxu0
    %1343 = vmatprep.mubr.f32.mxu0 0.0
    %1344 = vmatmul.mubr.f32.gmra.mrb[0].mxu0 %v1272
    %v1345 = vpop.f32.mrb[0].mxu0
    %v1346 = vadd.f32 %v1263, %v1345
    %v1347 = vpop.f32.mrb[0].mxu0
    %1348 = vdwg.mxu0
    %v1351 = vunpack.c.l.s4 1966171168
    %v1352 = vunpack.c.0.s8 %v1351
    %v1353 = vlaneseq
    %v1354 = vshrl.u32 %v1353, 7
    %v1355 = vsub.s32 %v1352, %v1354
    %v1356 = vrot.slane %v1341, %v1355
    %v1357 = vcombine.high %v1356, %v1356
    %v1359 = vunpack.c.l.s4 1966171168
    %v1360 = vunpack.c.0.s8 %v1359
    %v1361 = vlaneseq
    %v1362 = vshrl.u32 %v1361, 7
    %v1363 = vsub.s32 %v1360, %v1362
    %v1364 = vrot.slane %v1356, %v1363
    %v1366 = vunpack.c.l.s4 1966171168
    %v1367 = vunpack.c.0.s8 %v1366
    %v1368 = vlaneseq
    %v1369 = vshrl.u32 %v1368, 7
    %v1370 = vsub.s32 %v1367, %v1369
    %v1371 = vrot.slane %v1357, %v1370
    %1374 = vst [vmem:[%s4] sm:$0x1] %v1364
    %1375 = vst [vmem:[%s4 + $0x8] sm:$0x1] %v1371
    %v1376 = vcombine.high %v1364, %v1364
    %v1377 = vcombine.high %v1371, %v1371
    %1380 = vst [vmem:[%s4 + $0x1] sm:$0x1] %v1376
    %1381 = vst [vmem:[%s4 + $0x9] sm:$0x1] %v1377
    %v1382 = vcombine.high %v1341, %v1341
    %v1384 = vunpack.c.l.s4 1966171168
    %v1385 = vunpack.c.0.s8 %v1384
    %v1386 = vlaneseq
    %v1387 = vshrl.u32 %v1386, 7
    %v1388 = vsub.s32 %v1385, %v1387
    %v1389 = vrot.slane %v1382, %v1388
    %v1390 = vcombine.high %v1389, %v1389
    %v1392 = vunpack.c.l.s4 1966171168
    %v1393 = vunpack.c.0.s8 %v1392
    %v1394 = vlaneseq
    %v1395 = vshrl.u32 %v1394, 7
    %v1396 = vsub.s32 %v1393, %v1395
    %v1397 = vrot.slane %v1389, %v1396
    %v1399 = vunpack.c.l.s4 1966171168
    %v1400 = vunpack.c.0.s8 %v1399
    %v1401 = vlaneseq
    %v1402 = vshrl.u32 %v1401, 7
    %v1403 = vsub.s32 %v1400, %v1402
    %v1404 = vrot.slane %v1390, %v1403
    %1407 = vst [vmem:[%s4 + $0x2] sm:$0x1] %v1397
    %1408 = vst [vmem:[%s4 + $0xa] sm:$0x1] %v1404
    %v1409 = vcombine.high %v1397, %v1397
    %v1410 = vcombine.high %v1404, %v1404
    %1413 = vst [vmem:[%s4 + $0x3] sm:$0x1] %v1409
    %1414 = vst [vmem:[%s4 + $0xb] sm:$0x1] %v1410
    %v1417 = vunpack.c.l.s4 1966171168
    %v1418 = vunpack.c.0.s8 %v1417
    %v1419 = vlaneseq
    %v1420 = vshrl.u32 %v1419, 7
    %v1421 = vsub.s32 %v1418, %v1420
    %v1422 = vrot.slane %v1346, %v1421
    %v1423 = vcombine.high %v1422, %v1422
    %v1425 = vunpack.c.l.s4 1966171168
    %v1426 = vunpack.c.0.s8 %v1425
    %v1427 = vlaneseq
    %v1428 = vshrl.u32 %v1427, 7
    %v1429 = vsub.s32 %v1426, %v1428
    %v1430 = vrot.slane %v1422, %v1429
    %v1432 = vunpack.c.l.s4 1966171168
    %v1433 = vunpack.c.0.s8 %v1432
    %v1434 = vlaneseq
    %v1435 = vshrl.u32 %v1434, 7
    %v1436 = vsub.s32 %v1433, %v1435
    %v1437 = vrot.slane %v1423, %v1436
    %1440 = vst [vmem:[%s4 + $0x4] sm:$0x1] %v1430
    %1441 = vst [vmem:[%s4 + $0xc] sm:$0x1] %v1437
    %v1442 = vcombine.high %v1430, %v1430
    %v1443 = vcombine.high %v1437, %v1437
    %1446 = vst [vmem:[%s4 + $0x5] sm:$0x1] %v1442
    %1447 = vst [vmem:[%s4 + $0xd] sm:$0x1] %v1443
    %v1448 = vcombine.high %v1346, %v1346
    %v1450 = vunpack.c.l.s4 1966171168
    %v1451 = vunpack.c.0.s8 %v1450
    %v1452 = vlaneseq
    %v1453 = vshrl.u32 %v1452, 7
    %v1454 = vsub.s32 %v1451, %v1453
    %v1455 = vrot.slane %v1448, %v1454
    %v1456 = vcombine.high %v1455, %v1455
    %v1458 = vunpack.c.l.s4 1966171168
    %v1459 = vunpack.c.0.s8 %v1458
    %v1460 = vlaneseq
    %v1461 = vshrl.u32 %v1460, 7
    %v1462 = vsub.s32 %v1459, %v1461
    %v1463 = vrot.slane %v1455, %v1462
    %v1465 = vunpack.c.l.s4 1966171168
    %v1466 = vunpack.c.0.s8 %v1465
    %v1467 = vlaneseq
    %v1468 = vshrl.u32 %v1467, 7
    %v1469 = vsub.s32 %v1466, %v1468
    %v1470 = vrot.slane %v1456, %v1469
    %1473 = vst [vmem:[%s4 + $0x6] sm:$0x1] %v1463
    %1474 = vst [vmem:[%s4 + $0xe] sm:$0x1] %v1470
    %v1475 = vcombine.high %v1463, %v1463
    %v1476 = vcombine.high %v1470, %v1470
    %1479 = vst [vmem:[%s4 + $0x7] sm:$0x1] %v1475
    %1480 = vst [vmem:[%s4 + $0xf] sm:$0x1] %v1476
    %v1481 = vrot.slane %v1221, 7
    %1482 = vrot.lane.b32.xlu0 %v1220, 32
    %v1483 = vpop.permute.xlu0 %1482
    %1484 = vrot.lane.b32.xlu0 %v1481, 32
    %v1485 = vpop.permute.xlu0 %1484
    %vm1488 = vcmask 261127
    %1489 = vst.msk [vmem:[#allocation5 - $0x7] sm:$0x80] %vm1488, %v1483
    %vm1490 = vcmask 253952
    %1491 = vst.msk [vmem:[#allocation5 + $0x1] sm:$0x1] %vm1490, %v1485
    %v1494 = vrot.slane %v1209, 7
    %1495 = vrot.lane.b32.xlu0 %v1208, 96
    %v1496 = vpop.permute.xlu0 %1495
    %1497 = vrot.lane.b32.xlu0 %v1494, 96
    %v1498 = vpop.permute.xlu0 %1497
    %1501 = vst.msk [vmem:[#allocation6 - $0x7] sm:$0x80] %vm1488, %v1496
    %1502 = vst.msk [vmem:[#allocation6 + $0x1] sm:$0x1] %vm1490, %v1498
    // Predicated region
    $region22: #{decoder_forward.1} parent=1 // pred_check
      _
    $region23: #{decoder_forward.1} parent=1 // pred_check_branch
      %1504 = sbr.rel (0) target = $region25
    $region24: #{decoder_forward.1} parent=1 // pred_region
      _
    $region25: #{decoder_forward.1} parent=1 // pred_fallthru
      _
    // Predicated region
    $region26: #{decoder_forward.1} parent=1 // pred_check
      _
    $region27: #{decoder_forward.1} parent=1 // pred_check_branch
      %1506 = sbr.rel (0) target = $region29
    $region28: #{decoder_forward.1} parent=1 // pred_region
      %s1508 = ssub.s32 32, 32
      %1509 = vsyncadd [#allocation4], %s1508
      %s1511 = sshll.u32 [#allocation5], 4
      %s1512 = int_to_ptr.vmem [resolvable:$true] %s1511
      %1514 = dma.vmem_to_hbm [thread:$0]  %s1512, 32, %s5, [#allocation4]
    $region29: #{decoder_forward.1} parent=1 // pred_fallthru
      _
    // Predicated region
    $region30: #{decoder_forward.1} parent=1 // pred_check
      _
    $region31: #{decoder_forward.1} parent=1 // pred_check_branch
      %1516 = sbr.rel (0) target = $region33
    $region32: #{decoder_forward.1} parent=1 // pred_region
      %s1518 = ssub.s32 32, 32
      %1519 = vsyncadd [#allocation7], %s1518
      %s1521 = sshll.u32 [#allocation6], 4
      %s1522 = int_to_ptr.vmem [resolvable:$true] %s1521
      %1524 = dma.vmem_to_hbm [thread:$0]  %s1522, 32, %s6, [#allocation7]
    $region33: #{decoder_forward.1} parent=1 // pred_fallthru
      _
    // Predicated region
    $region34: #{decoder_forward.1} parent=1 // pred_check
      _
    $region35: #{decoder_forward.1} parent=1 // pred_check_branch
      %1526 = sbr.rel (0) target = $region37
    $region36: #{decoder_forward.1} parent=1 // pred_region
      _
    $region37: #{decoder_forward.1} parent=1 // pred_fallthru
      _
    // Predicated region
    $region38: #{decoder_forward.1} parent=1 // pred_check
      _
    $region39: #{decoder_forward.1} parent=1 // pred_check_branch
      %1528 = sbr.rel (0) target = $region41
    $region40: #{decoder_forward.1} parent=1 // pred_region
      %1529 = dma.done [#allocation4], 32
    $region41: #{decoder_forward.1} parent=1 // pred_fallthru
      _
    // Predicated region
    $region42: #{decoder_forward.1} parent=1 // pred_check
      _
    $region43: #{decoder_forward.1} parent=1 // pred_check_branch
      %1531 = sbr.rel (0) target = $region45
    $region44: #{decoder_forward.1} parent=1 // pred_region
      %1532 = dma.done [#allocation7], 32
    $region45: #{decoder_forward.1} parent=1 // pred_fallthru
      _
    %1533 = vsyncpa [#allocation3], 1
    %1534 = vsyncpa [#allocation4], 1
    %1535 = vsyncpa [#allocation7], 1

</llo_original>
